<compile_context>
chip_gen: v5e
topology: v5e:2x2
jax: 0.10.0
libtpu: 0.0.40
codegen_flags: <defaults>
</compile_context>

<pallas_src>
import jax
import jax.numpy as jnp
from jax import lax
from jax.experimental import pallas as pl
from jax.experimental.pallas import tpu as pltpu


# -----------------------------------------------------------------------------
# Fused forward kernel: n_layers x (LSTM over time) + FC + sigmoid, all in VMEM.
# -----------------------------------------------------------------------------
def _make_fused_kernel(n_layers, seq_len, hidden_dim):
    T, H = seq_len, hidden_dim

    def kernel(*refs):
        idx = 0
        x_ref = refs[idx]; idx += 1           # (T, Bp, E)  time-major embeddings
        h0_ref = refs[idx]; idx += 1          # (L, Bp, H)
        c0_ref = refs[idx]; idx += 1          # (L, Bp, H)
        w_x, w_h, b = [], [], []
        for _ in range(n_layers):
            w_x.append(refs[idx])             # (D_in, 4H)  = W_ih^T
            w_h.append(refs[idx + 1])         # (H, 4H)     = W_hh^T
            b.append(refs[idx + 2])           # (1, 4H)     = b_ih + b_hh
            idx += 3
        fcw_ref = refs[idx]; idx += 1         # (H, O)
        fcb_ref = refs[idx]; idx += 1         # (1, O)
        out_ref = refs[idx]; idx += 1         # (Bp, O)
        hn_ref = refs[idx]; idx += 1          # (L, Bp, H)
        cn_ref = refs[idx]; idx += 1          # (L, Bp, H)
        seq_ref = refs[idx]                   # (T, Bp, H) VMEM scratch, reused in place

        def run_layer(l, in_ref, write_seq):
            # Hoist weight / bias loads out of the time loop.
            wx = w_x[l][...]
            wh = w_h[l][...]
            bias = b[l][...]

            def step(t, carry):
                h, c = carry
                x_t = in_ref[t]                                   # (Bp, D_in)
                # PyTorch gate order along the 4H axis: [i, f, g, o]
                gates = (jnp.dot(x_t, wx, preferred_element_type=jnp.float32)
                         + jnp.dot(h, wh, preferred_element_type=jnp.float32)
                         + bias)                                  # (Bp, 4H)
                i = jax.nn.sigmoid(gates[:, 0 * H:1 * H])
                f = jax.nn.sigmoid(gates[:, 1 * H:2 * H])
                g = jnp.tanh(gates[:, 2 * H:3 * H])
                o = jax.nn.sigmoid(gates[:, 3 * H:4 * H])
                c_new = f * c + i * g
                h_new = o * jnp.tanh(c_new)
                if write_seq:
                    # Safe in-place reuse: slot t was already consumed this step.
                    seq_ref[t] = h_new
                return (h_new, c_new)

            h_l, c_l = lax.fori_loop(0, T, step, (h0_ref[l], c0_ref[l]), unroll=True)
            hn_ref[l] = h_l
            cn_ref[l] = c_l
            return h_l

        cur_in = x_ref
        h_top = None
        for l in range(n_layers):
            # Last layer's per-step hidden sequence is never needed -> skip the stores.
            h_top = run_layer(l, cur_in, write_seq=(l < n_layers - 1))
            cur_in = seq_ref

        # TODO(synk): inter-layer / output dropout is identity here (eval semantics).
        y = (jnp.dot(h_top, fcw_ref[...], preferred_element_type=jnp.float32)
             + fcb_ref[...])
        out_ref[...] = jax.nn.sigmoid(y).astype(out_ref.dtype)

    return kernel


# -----------------------------------------------------------------------------
# Wrapper: embedding lookup (plain JAX gather), batch padding, single pallas_call.
# -----------------------------------------------------------------------------
def sentiment_rnn_forward(fused, x_ids, hidden):
    """x_ids: (B, T) int32 token ids. hidden: (h0, c0) each (n_layers, B, H)."""
    h0, c0 = hidden
    n_layers, B, H = h0.shape
    T = x_ids.shape[1]
    O = fused["fc_w_t"].shape[1]

    # Pad batch to a multiple of 8 so every (B, *) tile uses full sublanes.
    Bp = ((B + 7) // 8) * 8
    pad = Bp - B
    if pad:
        x_ids = jnp.pad(x_ids, ((0, pad), (0, 0)))         # token 0 is a valid id
        h0 = jnp.pad(h0, ((0, 0), (0, pad), (0, 0)))
        c0 = jnp.pad(c0, ((0, 0), (0, pad), (0, 0)))

    # Time-major embeddings directly from the gather (transpose the tiny id matrix,
    # never the activation tensor).
    x_seq = jnp.take(fused["embedding"], x_ids.T, axis=0).astype(jnp.float32)  # (T, Bp, E)

    inputs = [x_seq, h0, c0]
    for l in range(n_layers):
        inputs += [fused["w_x"][l], fused["w_h"][l], fused["b"][l]]
    inputs += [fused["fc_w_t"], fused["fc_b"]]

    kernel = _make_fused_kernel(n_layers, T, H)
    sig, h_n, c_n = pl.pallas_call(
        kernel,
        out_shape=(jax.ShapeDtypeStruct((Bp, O), jnp.float32),
                   jax.ShapeDtypeStruct((n_layers, Bp, H), jnp.float32),
                   jax.ShapeDtypeStruct((n_layers, Bp, H), jnp.float32)),
        scratch_shapes=[pltpu.VMEM((T, Bp, H), jnp.float32)],
    )(*inputs)

    if pad:
        sig = sig[:B]
        h_n = h_n[:, :B]
        c_n = c_n[:, :B]
    return sig, (h_n, c_n)


# -----------------------------------------------------------------------------
# One-time weight preparation (transpose + bias fusion), done outside the kernel.
# -----------------------------------------------------------------------------
def prepare_fused_params(params):
    return {
        "embedding": params["embedding"],
        "w_x": [jnp.transpose(w) for w in params["w_ih"]],            # (D_in, 4H)
        "w_h": [jnp.transpose(w) for w in params["w_hh"]],            # (H, 4H)
        "b":   [(bi + bh).reshape(1, -1)
                for bi, bh in zip(params["b_ih"], params["b_hh"])],   # (1, 4H)
        "fc_w_t": jnp.transpose(params["fc_w"]),                      # (H, O)
        "fc_b": params["fc_b"].reshape(1, -1),                        # (1, O)
    }


# -----------------------------------------------------------------------------
# Pure-JAX reference (verification only), operating on torch-shaped params.
# -----------------------------------------------------------------------------
def _lstm_layer_ref(x_seq, h0, c0, w_ih, w_hh, b_ih, b_hh):
    b = b_ih + b_hh

    def step(carry, x_t):
        h, c = carry
        gates = x_t @ w_ih.T + h @ w_hh.T + b
        i, f, g, o = jnp.split(gates, 4, axis=-1)
        i, f, o = jax.nn.sigmoid(i), jax.nn.sigmoid(f), jax.nn.sigmoid(o)
        g = jnp.tanh(g)
        c = f * c + i * g
        h = o * jnp.tanh(c)
        return (h, c), h

    (h_l, c_l), hs = lax.scan(step, (h0, c0), x_seq)
    return hs, h_l, c_l


def sentiment_rnn_ref(params, x_ids, hidden):
    h0_all, c0_all = hidden
    n_layers = h0_all.shape[0]
    x = jnp.transpose(jnp.take(params["embedding"], x_ids, axis=0), (1, 0, 2))
    h_n, c_n = [], []
    for l in range(n_layers):
        x, h_last, c_last = _lstm_layer_ref(
            x, h0_all[l], c0_all[l],
            params["w_ih"][l], params["w_hh"][l],
            params["b_ih"][l], params["b_hh"][l])
        h_n.append(h_last)
        c_n.append(c_last)
    last = x[-1]
    out = jax.nn.sigmoid(last @ params["fc_w"].T + params["fc_b"])
    return out, (jnp.stack(h_n), jnp.stack(c_n))


# -----------------------------------------------------------------------------
# Deterministic parameter construction (synthetic, torch-like shapes & ranges).
# -----------------------------------------------------------------------------
def init_params(key, vocab_size, output_size, embedding_dim, hidden_dim, n_layers):
    keys = jax.random.split(key, 3 + 4 * n_layers)
    k = 1.0 / jnp.sqrt(hidden_dim)
    params = {
        "embedding": jax.random.normal(keys[0], (vocab_size, embedding_dim), jnp.float32),
        "fc_w": jax.random.uniform(keys[1], (output_size, hidden_dim), jnp.float32, -k, k),
        "fc_b": jax.random.uniform(keys[2], (output_size,), jnp.float32, -k, k),
        "w_ih": [], "w_hh": [], "b_ih": [], "b_hh": [],
    }
    for l in range(n_layers):
        d_in = embedding_dim if l == 0 else hidden_dim
        kk = keys[3 + 4 * l: 3 + 4 * (l + 1)]
        params["w_ih"].append(jax.random.uniform(kk[0], (4 * hidden_dim, d_in), jnp.float32, -k, k))
        params["w_hh"].append(jax.random.uniform(kk[1], (4 * hidden_dim, hidden_dim), jnp.float32, -k, k))
        params["b_ih"].append(jax.random.uniform(kk[2], (4 * hidden_dim,), jnp.float32, -k, k))
        params["b_hh"].append(jax.random.uniform(kk[3], (4 * hidden_dim,), jnp.float32, -k, k))
    return params


if __name__ == "__main__":
    vocab_size, output_size = 50, 1
    embedding_dim, hidden_dim, n_layers = 32, 32, 2
    batch, seq_len = 2, 8

    key = jax.random.PRNGKey(0)
    k_params, k_ids = jax.random.split(key)
    params = init_params(k_params, vocab_size, output_size,
                         embedding_dim, hidden_dim, n_layers)
    fused = prepare_fused_params(params)   # one-time transpose / bias fusion

    x_ids = jax.random.randint(k_ids, (batch, seq_len), 0, vocab_size, jnp.int32)
    # init_hidden(batch): zeros, shape (n_layers, B, H)
    hidden = (jnp.zeros((n_layers, batch, hidden_dim), jnp.float32),
              jnp.zeros((n_layers, batch, hidden_dim), jnp.float32))

    sig_out, (h_n, c_n) = sentiment_rnn_forward(fused, x_ids, hidden)
    jax.block_until_ready((sig_out, h_n, c_n))

    # Verify against pure-JAX reference.
    ref_out, (ref_h, ref_c) = sentiment_rnn_ref(params, x_ids, hidden)
    assert sig_out.shape == (batch, output_size)
    assert h_n.shape == (n_layers, batch, hidden_dim)
    assert c_n.shape == (n_layers, batch, hidden_dim)
    assert jnp.allclose(sig_out, ref_out, atol=1e-5, rtol=1e-5)
    assert jnp.allclose(h_n, ref_h, atol=1e-5, rtol=1e-5)
    assert jnp.allclose(c_n, ref_c, atol=1e-5, rtol=1e-5)

    print("KERNEL_OK")
</pallas_src>

<mosaic_0001>
module attributes {stable_mosaic.version = 11 : i64} {
  func.func @kernel(%arg0: memref<8x8x32xf32, #tpu.memory_space<vmem>>, %arg1: memref<2x8x32xf32, #tpu.memory_space<vmem>>, %arg2: memref<2x8x32xf32, #tpu.memory_space<vmem>>, %arg3: memref<32x128xf32, #tpu.memory_space<vmem>>, %arg4: memref<32x128xf32, #tpu.memory_space<vmem>>, %arg5: memref<1x128xf32, #tpu.memory_space<vmem>>, %arg6: memref<32x128xf32, #tpu.memory_space<vmem>>, %arg7: memref<32x128xf32, #tpu.memory_space<vmem>>, %arg8: memref<1x128xf32, #tpu.memory_space<vmem>>, %arg9: memref<32x1xf32, #tpu.memory_space<vmem>>, %arg10: memref<1x1xf32, #tpu.memory_space<vmem>>, %arg11: memref<8x1xf32, #tpu.memory_space<vmem>>, %arg12: memref<2x8x32xf32, #tpu.memory_space<vmem>>, %arg13: memref<2x8x32xf32, #tpu.memory_space<vmem>>, %arg14: memref<8x8x32xf32, #tpu.memory_space<vmem>>) attributes {dimension_semantics = [], scalar_prefetch = 0 : i64, scratch_operands = 1 : i64, tpu.core_type = #tpu.core_type<tc>} {
    %c0 = arith.constant 0 : index
    %c0_0 = arith.constant 0 : index
    %0 = vector.load %arg3[%c0, %c0_0] : memref<32x128xf32, #tpu.memory_space<vmem>>, vector<32x128xf32>
    %c0_1 = arith.constant 0 : index
    %c0_2 = arith.constant 0 : index
    %1 = vector.load %arg4[%c0_1, %c0_2] : memref<32x128xf32, #tpu.memory_space<vmem>>, vector<32x128xf32>
    %c0_3 = arith.constant 0 : index
    %c0_4 = arith.constant 0 : index
    %2 = vector.load %arg5[%c0_3, %c0_4] : memref<1x128xf32, #tpu.memory_space<vmem>>, vector<1x128xf32>
    %c0_5 = arith.constant 0 : index
    %c0_6 = arith.constant 0 : index
    %c0_7 = arith.constant 0 : index
    %3 = vector.load %arg1[%c0_5, %c0_6, %c0_7] : memref<2x8x32xf32, #tpu.memory_space<vmem>>, vector<1x8x32xf32>
    %4 = vector.shape_cast %3 : vector<1x8x32xf32> to vector<8x32xf32>
    %c0_8 = arith.constant 0 : index
    %c0_9 = arith.constant 0 : index
    %c0_10 = arith.constant 0 : index
    %5 = vector.load %arg2[%c0_8, %c0_9, %c0_10] : memref<2x8x32xf32, #tpu.memory_space<vmem>>, vector<1x8x32xf32>
    %6 = vector.shape_cast %5 : vector<1x8x32xf32> to vector<8x32xf32>
    %c0_i32 = arith.constant 0 : i32
    %7 = arith.index_cast %c0_i32 : i32 to index
    %c0_11 = arith.constant 0 : index
    %c0_12 = arith.constant 0 : index
    %8 = vector.load %arg0[%7, %c0_11, %c0_12] : memref<8x8x32xf32, #tpu.memory_space<vmem>>, vector<1x8x32xf32>
    %9 = vector.shape_cast %8 : vector<1x8x32xf32> to vector<8x32xf32>
    %cst = arith.constant dense<0.000000e+00> : vector<8x128xf32>
    %10 = tpu.matmul %9, %0, %cst {dimension_numbers = #tpu.dot_dimension_numbers<[1], [0], [0], [1], [0, 0, 1, 1], [], []>} : vector<8x32xf32>, vector<32x128xf32>, vector<8x128xf32> -> vector<8x128xf32>
    %cst_13 = arith.constant dense<0.000000e+00> : vector<8x128xf32>
    %11 = tpu.matmul %4, %1, %cst_13 {dimension_numbers = #tpu.dot_dimension_numbers<[1], [0], [0], [1], [0, 0, 1, 1], [], []>} : vector<8x32xf32>, vector<32x128xf32>, vector<8x128xf32> -> vector<8x128xf32>
    %12 = arith.addf %10, %11 : vector<8x128xf32>
    %13 = vector.broadcast %2 : vector<1x128xf32> to vector<8x128xf32>
    %14 = arith.addf %12, %13 : vector<8x128xf32>
    %15 = vector.extract_strided_slice %14 {offsets = [0, 0], sizes = [8, 32], strides = [1, 1]} : vector<8x128xf32> to vector<8x32xf32>
    %16 = arith.negf %15 : vector<8x32xf32>
    %17 = math.exp %16 : vector<8x32xf32>
    %cst_14 = arith.constant 1.000000e+00 : f32
    %18 = vector.broadcast %cst_14 : f32 to vector<8x32xf32>
    %19 = arith.addf %18, %17 : vector<8x32xf32>
    %20 = arith.divf %18, %19 : vector<8x32xf32>
    %21 = vector.extract_strided_slice %14 {offsets = [0, 32], sizes = [8, 32], strides = [1, 1]} : vector<8x128xf32> to vector<8x32xf32>
    %22 = arith.negf %21 : vector<8x32xf32>
    %23 = math.exp %22 : vector<8x32xf32>
    %cst_15 = arith.constant 1.000000e+00 : f32
    %24 = vector.broadcast %cst_15 : f32 to vector<8x32xf32>
    %25 = arith.addf %24, %23 : vector<8x32xf32>
    %26 = arith.divf %24, %25 : vector<8x32xf32>
    %27 = vector.extract_strided_slice %14 {offsets = [0, 64], sizes = [8, 32], strides = [1, 1]} : vector<8x128xf32> to vector<8x32xf32>
    %28 = math.tanh %27 : vector<8x32xf32>
    %29 = vector.extract_strided_slice %14 {offsets = [0, 96], sizes = [8, 32], strides = [1, 1]} : vector<8x128xf32> to vector<8x32xf32>
    %30 = arith.negf %29 : vector<8x32xf32>
    %31 = math.exp %30 : vector<8x32xf32>
    %cst_16 = arith.constant 1.000000e+00 : f32
    %32 = vector.broadcast %cst_16 : f32 to vector<8x32xf32>
    %33 = arith.addf %32, %31 : vector<8x32xf32>
    %34 = arith.divf %32, %33 : vector<8x32xf32>
    %35 = arith.mulf %26, %6 : vector<8x32xf32>
    %36 = arith.mulf %20, %28 : vector<8x32xf32>
    %37 = arith.addf %35, %36 : vector<8x32xf32>
    %38 = math.tanh %37 : vector<8x32xf32>
    %39 = arith.mulf %34, %38 : vector<8x32xf32>
    %40 = arith.index_cast %c0_i32 : i32 to index
    %c0_17 = arith.constant 0 : index
    %c0_18 = arith.constant 0 : index
    %41 = vector.load %arg14[%40, %c0_17, %c0_18] : memref<8x8x32xf32, #tpu.memory_space<vmem>>, vector<1x8x32xf32>
    %42 = vector.shape_cast %41 : vector<1x8x32xf32> to vector<8x32xf32>
    %43 = vector.shape_cast %39 : vector<8x32xf32> to vector<1x8x32xf32>
    tpu.vector_store %arg14[%40, %c0_17, %c0_18], %43 {strides = array<i32>} : memref<8x8x32xf32, #tpu.memory_space<vmem>>, vector<1x8x32xf32>,
    %c1_i32 = arith.constant 1 : i32
    %44 = arith.index_cast %c1_i32 : i32 to index
    %c0_19 = arith.constant 0 : index
    %c0_20 = arith.constant 0 : index
    %45 = vector.load %arg0[%44, %c0_19, %c0_20] : memref<8x8x32xf32, #tpu.memory_space<vmem>>, vector<1x8x32xf32>
    %46 = vector.shape_cast %45 : vector<1x8x32xf32> to vector<8x32xf32>
    %cst_21 = arith.constant dense<0.000000e+00> : vector<8x128xf32>
    %47 = tpu.matmul %46, %0, %cst_21 {dimension_numbers = #tpu.dot_dimension_numbers<[1], [0], [0], [1], [0, 0, 1, 1], [], []>} : vector<8x32xf32>, vector<32x128xf32>, vector<8x128xf32> -> vector<8x128xf32>
    %cst_22 = arith.constant dense<0.000000e+00> : vector<8x128xf32>
    %48 = tpu.matmul %39, %1, %cst_22 {dimension_numbers = #tpu.dot_dimension_numbers<[1], [0], [0], [1], [0, 0, 1, 1], [], []>} : vector<8x32xf32>, vector<32x128xf32>, vector<8x128xf32> -> vector<8x128xf32>
    %49 = arith.addf %47, %48 : vector<8x128xf32>
    %50 = vector.broadcast %2 : vector<1x128xf32> to vector<8x128xf32>
    %51 = arith.addf %49, %50 : vector<8x128xf32>
    %52 = vector.extract_strided_slice %51 {offsets = [0, 0], sizes = [8, 32], strides = [1, 1]} : vector<8x128xf32> to vector<8x32xf32>
    %53 = arith.negf %52 : vector<8x32xf32>
    %54 = math.exp %53 : vector<8x32xf32>
    %cst_23 = arith.constant 1.000000e+00 : f32
    %55 = vector.broadcast %cst_23 : f32 to vector<8x32xf32>
    %56 = arith.addf %55, %54 : vector<8x32xf32>
    %57 = arith.divf %55, %56 : vector<8x32xf32>
    %58 = vector.extract_strided_slice %51 {offsets = [0, 32], sizes = [8, 32], strides = [1, 1]} : vector<8x128xf32> to vector<8x32xf32>
    %59 = arith.negf %58 : vector<8x32xf32>
    %60 = math.exp %59 : vector<8x32xf32>
    %cst_24 = arith.constant 1.000000e+00 : f32
    %61 = vector.broadcast %cst_24 : f32 to vector<8x32xf32>
    %62 = arith.addf %61, %60 : vector<8x32xf32>
    %63 = arith.divf %61, %62 : vector<8x32xf32>
    %64 = vector.extract_strided_slice %51 {offsets = [0, 64], sizes = [8, 32], strides = [1, 1]} : vector<8x128xf32> to vector<8x32xf32>
    %65 = math.tanh %64 : vector<8x32xf32>
    %66 = vector.extract_strided_slice %51 {offsets = [0, 96], sizes = [8, 32], strides = [1, 1]} : vector<8x128xf32> to vector<8x32xf32>
    %67 = arith.negf %66 : vector<8x32xf32>
    %68 = math.exp %67 : vector<8x32xf32>
    %cst_25 = arith.constant 1.000000e+00 : f32
    %69 = vector.broadcast %cst_25 : f32 to vector<8x32xf32>
    %70 = arith.addf %69, %68 : vector<8x32xf32>
    %71 = arith.divf %69, %70 : vector<8x32xf32>
    %72 = arith.mulf %63, %37 : vector<8x32xf32>
    %73 = arith.mulf %57, %65 : vector<8x32xf32>
    %74 = arith.addf %72, %73 : vector<8x32xf32>
    %75 = math.tanh %74 : vector<8x32xf32>
    %76 = arith.mulf %71, %75 : vector<8x32xf32>
    %77 = arith.index_cast %c1_i32 : i32 to index
    %c0_26 = arith.constant 0 : index
    %c0_27 = arith.constant 0 : index
    %78 = vector.load %arg14[%77, %c0_26, %c0_27] : memref<8x8x32xf32, #tpu.memory_space<vmem>>, vector<1x8x32xf32>
    %79 = vector.shape_cast %78 : vector<1x8x32xf32> to vector<8x32xf32>
    %80 = vector.shape_cast %76 : vector<8x32xf32> to vector<1x8x32xf32>
    tpu.vector_store %arg14[%77, %c0_26, %c0_27], %80 {strides = array<i32>} : memref<8x8x32xf32, #tpu.memory_space<vmem>>, vector<1x8x32xf32>,
    %c2_i32 = arith.constant 2 : i32
    %81 = arith.index_cast %c2_i32 : i32 to index
    %c0_28 = arith.constant 0 : index
    %c0_29 = arith.constant 0 : index
    %82 = vector.load %arg0[%81, %c0_28, %c0_29] : memref<8x8x32xf32, #tpu.memory_space<vmem>>, vector<1x8x32xf32>
    %83 = vector.shape_cast %82 : vector<1x8x32xf32> to vector<8x32xf32>
    %cst_30 = arith.constant dense<0.000000e+00> : vector<8x128xf32>
    %84 = tpu.matmul %83, %0, %cst_30 {dimension_numbers = #tpu.dot_dimension_numbers<[1], [0], [0], [1], [0, 0, 1, 1], [], []>} : vector<8x32xf32>, vector<32x128xf32>, vector<8x128xf32> -> vector<8x128xf32>
    %cst_31 = arith.constant dense<0.000000e+00> : vector<8x128xf32>
    %85 = tpu.matmul %76, %1, %cst_31 {dimension_numbers = #tpu.dot_dimension_numbers<[1], [0], [0], [1], [0, 0, 1, 1], [], []>} : vector<8x32xf32>, vector<32x128xf32>, vector<8x128xf32> -> vector<8x128xf32>
    %86 = arith.addf %84, %85 : vector<8x128xf32>
    %87 = vector.broadcast %2 : vector<1x128xf32> to vector<8x128xf32>
    %88 = arith.addf %86, %87 : vector<8x128xf32>
    %89 = vector.extract_strided_slice %88 {offsets = [0, 0], sizes = [8, 32], strides = [1, 1]} : vector<8x128xf32> to vector<8x32xf32>
    %90 = arith.negf %89 : vector<8x32xf32>
    %91 = math.exp %90 : vector<8x32xf32>
    %cst_32 = arith.constant 1.000000e+00 : f32
    %92 = vector.broadcast %cst_32 : f32 to vector<8x32xf32>
    %93 = arith.addf %92, %91 : vector<8x32xf32>
    %94 = arith.divf %92, %93 : vector<8x32xf32>
    %95 = vector.extract_strided_slice %88 {offsets = [0, 32], sizes = [8, 32], strides = [1, 1]} : vector<8x128xf32> to vector<8x32xf32>
    %96 = arith.negf %95 : vector<8x32xf32>
    %97 = math.exp %96 : vector<8x32xf32>
    %cst_33 = arith.constant 1.000000e+00 : f32
    %98 = vector.broadcast %cst_33 : f32 to vector<8x32xf32>
    %99 = arith.addf %98, %97 : vector<8x32xf32>
    %100 = arith.divf %98, %99 : vector<8x32xf32>
    %101 = vector.extract_strided_slice %88 {offsets = [0, 64], sizes = [8, 32], strides = [1, 1]} : vector<8x128xf32> to vector<8x32xf32>
    %102 = math.tanh %101 : vector<8x32xf32>
    %103 = vector.extract_strided_slice %88 {offsets = [0, 96], sizes = [8, 32], strides = [1, 1]} : vector<8x128xf32> to vector<8x32xf32>
    %104 = arith.negf %103 : vector<8x32xf32>
    %105 = math.exp %104 : vector<8x32xf32>
    %cst_34 = arith.constant 1.000000e+00 : f32
    %106 = vector.broadcast %cst_34 : f32 to vector<8x32xf32>
    %107 = arith.addf %106, %105 : vector<8x32xf32>
    %108 = arith.divf %106, %107 : vector<8x32xf32>
    %109 = arith.mulf %100, %74 : vector<8x32xf32>
    %110 = arith.mulf %94, %102 : vector<8x32xf32>
    %111 = arith.addf %109, %110 : vector<8x32xf32>
    %112 = math.tanh %111 : vector<8x32xf32>
    %113 = arith.mulf %108, %112 : vector<8x32xf32>
    %114 = arith.index_cast %c2_i32 : i32 to index
    %c0_35 = arith.constant 0 : index
    %c0_36 = arith.constant 0 : index
    %115 = vector.load %arg14[%114, %c0_35, %c0_36] : memref<8x8x32xf32, #tpu.memory_space<vmem>>, vector<1x8x32xf32>
    %116 = vector.shape_cast %115 : vector<1x8x32xf32> to vector<8x32xf32>
    %117 = vector.shape_cast %113 : vector<8x32xf32> to vector<1x8x32xf32>
    tpu.vector_store %arg14[%114, %c0_35, %c0_36], %117 {strides = array<i32>} : memref<8x8x32xf32, #tpu.memory_space<vmem>>, vector<1x8x32xf32>,
    %c3_i32 = arith.constant 3 : i32
    %118 = arith.index_cast %c3_i32 : i32 to index
    %c0_37 = arith.constant 0 : index
    %c0_38 = arith.constant 0 : index
    %119 = vector.load %arg0[%118, %c0_37, %c0_38] : memref<8x8x32xf32, #tpu.memory_space<vmem>>, vector<1x8x32xf32>
    %120 = vector.shape_cast %119 : vector<1x8x32xf32> to vector<8x32xf32>
    %cst_39 = arith.constant dense<0.000000e+00> : vector<8x128xf32>
    %121 = tpu.matmul %120, %0, %cst_39 {dimension_numbers = #tpu.dot_dimension_numbers<[1], [0], [0], [1], [0, 0, 1, 1], [], []>} : vector<8x32xf32>, vector<32x128xf32>, vector<8x128xf32> -> vector<8x128xf32>
    %cst_40 = arith.constant dense<0.000000e+00> : vector<8x128xf32>
    %122 = tpu.matmul %113, %1, %cst_40 {dimension_numbers = #tpu.dot_dimension_numbers<[1], [0], [0], [1], [0, 0, 1, 1], [], []>} : vector<8x32xf32>, vector<32x128xf32>, vector<8x128xf32> -> vector<8x128xf32>
    %123 = arith.addf %121, %122 : vector<8x128xf32>
    %124 = vector.broadcast %2 : vector<1x128xf32> to vector<8x128xf32>
    %125 = arith.addf %123, %124 : vector<8x128xf32>
    %126 = vector.extract_strided_slice %125 {offsets = [0, 0], sizes = [8, 32], strides = [1, 1]} : vector<8x128xf32> to vector<8x32xf32>
    %127 = arith.negf %126 : vector<8x32xf32>
    %128 = math.exp %127 : vector<8x32xf32>
    %cst_41 = arith.constant 1.000000e+00 : f32
    %129 = vector.broadcast %cst_41 : f32 to vector<8x32xf32>
    %130 = arith.addf %129, %128 : vector<8x32xf32>
    %131 = arith.divf %129, %130 : vector<8x32xf32>
    %132 = vector.extract_strided_slice %125 {offsets = [0, 32], sizes = [8, 32], strides = [1, 1]} : vector<8x128xf32> to vector<8x32xf32>
    %133 = arith.negf %132 : vector<8x32xf32>
    %134 = math.exp %133 : vector<8x32xf32>
    %cst_42 = arith.constant 1.000000e+00 : f32
    %135 = vector.broadcast %cst_42 : f32 to vector<8x32xf32>
    %136 = arith.addf %135, %134 : vector<8x32xf32>
    %137 = arith.divf %135, %136 : vector<8x32xf32>
    %138 = vector.extract_strided_slice %125 {offsets = [0, 64], sizes = [8, 32], strides = [1, 1]} : vector<8x128xf32> to vector<8x32xf32>
    %139 = math.tanh %138 : vector<8x32xf32>
    %140 = vector.extract_strided_slice %125 {offsets = [0, 96], sizes = [8, 32], strides = [1, 1]} : vector<8x128xf32> to vector<8x32xf32>
    %141 = arith.negf %140 : vector<8x32xf32>
    %142 = math.exp %141 : vector<8x32xf32>
    %cst_43 = arith.constant 1.000000e+00 : f32
    %143 = vector.broadcast %cst_43 : f32 to vector<8x32xf32>
    %144 = arith.addf %143, %142 : vector<8x32xf32>
    %145 = arith.divf %143, %144 : vector<8x32xf32>
    %146 = arith.mulf %137, %111 : vector<8x32xf32>
    %147 = arith.mulf %131, %139 : vector<8x32xf32>
    %148 = arith.addf %146, %147 : vector<8x32xf32>
    %149 = math.tanh %148 : vector<8x32xf32>
    %150 = arith.mulf %145, %149 : vector<8x32xf32>
    %151 = arith.index_cast %c3_i32 : i32 to index
    %c0_44 = arith.constant 0 : index
    %c0_45 = arith.constant 0 : index
    %152 = vector.load %arg14[%151, %c0_44, %c0_45] : memref<8x8x32xf32, #tpu.memory_space<vmem>>, vector<1x8x32xf32>
    %153 = vector.shape_cast %152 : vector<1x8x32xf32> to vector<8x32xf32>
    %154 = vector.shape_cast %150 : vector<8x32xf32> to vector<1x8x32xf32>
    tpu.vector_store %arg14[%151, %c0_44, %c0_45], %154 {strides = array<i32>} : memref<8x8x32xf32, #tpu.memory_space<vmem>>, vector<1x8x32xf32>,
    %c4_i32 = arith.constant 4 : i32
    %155 = arith.index_cast %c4_i32 : i32 to index
    %c0_46 = arith.constant 0 : index
    %c0_47 = arith.constant 0 : index
    %156 = vector.load %arg0[%155, %c0_46, %c0_47] : memref<8x8x32xf32, #tpu.memory_space<vmem>>, vector<1x8x32xf32>
    %157 = vector.shape_cast %156 : vector<1x8x32xf32> to vector<8x32xf32>
    %cst_48 = arith.constant dense<0.000000e+00> : vector<8x128xf32>
    %158 = tpu.matmul %157, %0, %cst_48 {dimension_numbers = #tpu.dot_dimension_numbers<[1], [0], [0], [1], [0, 0, 1, 1], [], []>} : vector<8x32xf32>, vector<32x128xf32>, vector<8x128xf32> -> vector<8x128xf32>
    %cst_49 = arith.constant dense<0.000000e+00> : vector<8x128xf32>
    %159 = tpu.matmul %150, %1, %cst_49 {dimension_numbers = #tpu.dot_dimension_numbers<[1], [0], [0], [1], [0, 0, 1, 1], [], []>} : vector<8x32xf32>, vector<32x128xf32>, vector<8x128xf32> -> vector<8x128xf32>
    %160 = arith.addf %158, %159 : vector<8x128xf32>
    %161 = vector.broadcast %2 : vector<1x128xf32> to vector<8x128xf32>
    %162 = arith.addf %160, %161 : vector<8x128xf32>
    %163 = vector.extract_strided_slice %162 {offsets = [0, 0], sizes = [8, 32], strides = [1, 1]} : vector<8x128xf32> to vector<8x32xf32>
    %164 = arith.negf %163 : vector<8x32xf32>
    %165 = math.exp %164 : vector<8x32xf32>
    %cst_50 = arith.constant 1.000000e+00 : f32
    %166 = vector.broadcast %cst_50 : f32 to vector<8x32xf32>
    %167 = arith.addf %166, %165 : vector<8x32xf32>
    %168 = arith.divf %166, %167 : vector<8x32xf32>
    %169 = vector.extract_strided_slice %162 {offsets = [0, 32], sizes = [8, 32], strides = [1, 1]} : vector<8x128xf32> to vector<8x32xf32>
    %170 = arith.negf %169 : vector<8x32xf32>
    %171 = math.exp %170 : vector<8x32xf32>
    %cst_51 = arith.constant 1.000000e+00 : f32
    %172 = vector.broadcast %cst_51 : f32 to vector<8x32xf32>
    %173 = arith.addf %172, %171 : vector<8x32xf32>
    %174 = arith.divf %172, %173 : vector<8x32xf32>
    %175 = vector.extract_strided_slice %162 {offsets = [0, 64], sizes = [8, 32], strides = [1, 1]} : vector<8x128xf32> to vector<8x32xf32>
    %176 = math.tanh %175 : vector<8x32xf32>
    %177 = vector.extract_strided_slice %162 {offsets = [0, 96], sizes = [8, 32], strides = [1, 1]} : vector<8x128xf32> to vector<8x32xf32>
    %178 = arith.negf %177 : vector<8x32xf32>
    %179 = math.exp %178 : vector<8x32xf32>
    %cst_52 = arith.constant 1.000000e+00 : f32
    %180 = vector.broadcast %cst_52 : f32 to vector<8x32xf32>
    %181 = arith.addf %180, %179 : vector<8x32xf32>
    %182 = arith.divf %180, %181 : vector<8x32xf32>
    %183 = arith.mulf %174, %148 : vector<8x32xf32>
    %184 = arith.mulf %168, %176 : vector<8x32xf32>
    %185 = arith.addf %183, %184 : vector<8x32xf32>
    %186 = math.tanh %185 : vector<8x32xf32>
    %187 = arith.mulf %182, %186 : vector<8x32xf32>
    %188 = arith.index_cast %c4_i32 : i32 to index
    %c0_53 = arith.constant 0 : index
    %c0_54 = arith.constant 0 : index
    %189 = vector.load %arg14[%188, %c0_53, %c0_54] : memref<8x8x32xf32, #tpu.memory_space<vmem>>, vector<1x8x32xf32>
    %190 = vector.shape_cast %189 : vector<1x8x32xf32> to vector<8x32xf32>
    %191 = vector.shape_cast %187 : vector<8x32xf32> to vector<1x8x32xf32>
    tpu.vector_store %arg14[%188, %c0_53, %c0_54], %191 {strides = array<i32>} : memref<8x8x32xf32, #tpu.memory_space<vmem>>, vector<1x8x32xf32>,
    %c5_i32 = arith.constant 5 : i32
    %192 = arith.index_cast %c5_i32 : i32 to index
    %c0_55 = arith.constant 0 : index
    %c0_56 = arith.constant 0 : index
    %193 = vector.load %arg0[%192, %c0_55, %c0_56] : memref<8x8x32xf32, #tpu.memory_space<vmem>>, vector<1x8x32xf32>
    %194 = vector.shape_cast %193 : vector<1x8x32xf32> to vector<8x32xf32>
    %cst_57 = arith.constant dense<0.000000e+00> : vector<8x128xf32>
    %195 = tpu.matmul %194, %0, %cst_57 {dimension_numbers = #tpu.dot_dimension_numbers<[1], [0], [0], [1], [0, 0, 1, 1], [], []>} : vector<8x32xf32>, vector<32x128xf32>, vector<8x128xf32> -> vector<8x128xf32>
    %cst_58 = arith.constant dense<0.000000e+00> : vector<8x128xf32>
    %196 = tpu.matmul %187, %1, %cst_58 {dimension_numbers = #tpu.dot_dimension_numbers<[1], [0], [0], [1], [0, 0, 1, 1], [], []>} : vector<8x32xf32>, vector<32x128xf32>, vector<8x128xf32> -> vector<8x128xf32>
    %197 = arith.addf %195, %196 : vector<8x128xf32>
    %198 = vector.broadcast %2 : vector<1x128xf32> to vector<8x128xf32>
    %199 = arith.addf %197, %198 : vector<8x128xf32>
    %200 = vector.extract_strided_slice %199 {offsets = [0, 0], sizes = [8, 32], strides = [1, 1]} : vector<8x128xf32> to vector<8x32xf32>
    %201 = arith.negf %200 : vector<8x32xf32>
    %202 = math.exp %201 : vector<8x32xf32>
    %cst_59 = arith.constant 1.000000e+00 : f32
    %203 = vector.broadcast %cst_59 : f32 to vector<8x32xf32>
    %204 = arith.addf %203, %202 : vector<8x32xf32>
    %205 = arith.divf %203, %204 : vector<8x32xf32>
    %206 = vector.extract_strided_slice %199 {offsets = [0, 32], sizes = [8, 32], strides = [1, 1]} : vector<8x128xf32> to vector<8x32xf32>
    %207 = arith.negf %206 : vector<8x32xf32>
    %208 = math.exp %207 : vector<8x32xf32>
    %cst_60 = arith.constant 1.000000e+00 : f32
    %209 = vector.broadcast %cst_60 : f32 to vector<8x32xf32>
    %210 = arith.addf %209, %208 : vector<8x32xf32>
    %211 = arith.divf %209, %210 : vector<8x32xf32>
    %212 = vector.extract_strided_slice %199 {offsets = [0, 64], sizes = [8, 32], strides = [1, 1]} : vector<8x128xf32> to vector<8x32xf32>
    %213 = math.tanh %212 : vector<8x32xf32>
    %214 = vector.extract_strided_slice %199 {offsets = [0, 96], sizes = [8, 32], strides = [1, 1]} : vector<8x128xf32> to vector<8x32xf32>
    %215 = arith.negf %214 : vector<8x32xf32>
    %216 = math.exp %215 : vector<8x32xf32>
    %cst_61 = arith.constant 1.000000e+00 : f32
    %217 = vector.broadcast %cst_61 : f32 to vector<8x32xf32>
    %218 = arith.addf %217, %216 : vector<8x32xf32>
    %219 = arith.divf %217, %218 : vector<8x32xf32>
    %220 = arith.mulf %211, %185 : vector<8x32xf32>
    %221 = arith.mulf %205, %213 : vector<8x32xf32>
    %222 = arith.addf %220, %221 : vector<8x32xf32>
    %223 = math.tanh %222 : vector<8x32xf32>
    %224 = arith.mulf %219, %223 : vector<8x32xf32>
    %225 = arith.index_cast %c5_i32 : i32 to index
    %c0_62 = arith.constant 0 : index
    %c0_63 = arith.constant 0 : index
    %226 = vector.load %arg14[%225, %c0_62, %c0_63] : memref<8x8x32xf32, #tpu.memory_space<vmem>>, vector<1x8x32xf32>
    %227 = vector.shape_cast %226 : vector<1x8x32xf32> to vector<8x32xf32>
    %228 = vector.shape_cast %224 : vector<8x32xf32> to vector<1x8x32xf32>
    tpu.vector_store %arg14[%225, %c0_62, %c0_63], %228 {strides = array<i32>} : memref<8x8x32xf32, #tpu.memory_space<vmem>>, vector<1x8x32xf32>,
    %c6_i32 = arith.constant 6 : i32
    %229 = arith.index_cast %c6_i32 : i32 to index
    %c0_64 = arith.constant 0 : index
    %c0_65 = arith.constant 0 : index
    %230 = vector.load %arg0[%229, %c0_64, %c0_65] : memref<8x8x32xf32, #tpu.memory_space<vmem>>, vector<1x8x32xf32>
    %231 = vector.shape_cast %230 : vector<1x8x32xf32> to vector<8x32xf32>
    %cst_66 = arith.constant dense<0.000000e+00> : vector<8x128xf32>
    %232 = tpu.matmul %231, %0, %cst_66 {dimension_numbers = #tpu.dot_dimension_numbers<[1], [0], [0], [1], [0, 0, 1, 1], [], []>} : vector<8x32xf32>, vector<32x128xf32>, vector<8x128xf32> -> vector<8x128xf32>
    %cst_67 = arith.constant dense<0.000000e+00> : vector<8x128xf32>
    %233 = tpu.matmul %224, %1, %cst_67 {dimension_numbers = #tpu.dot_dimension_numbers<[1], [0], [0], [1], [0, 0, 1, 1], [], []>} : vector<8x32xf32>, vector<32x128xf32>, vector<8x128xf32> -> vector<8x128xf32>
    %234 = arith.addf %232, %233 : vector<8x128xf32>
    %235 = vector.broadcast %2 : vector<1x128xf32> to vector<8x128xf32>
    %236 = arith.addf %234, %235 : vector<8x128xf32>
    %237 = vector.extract_strided_slice %236 {offsets = [0, 0], sizes = [8, 32], strides = [1, 1]} : vector<8x128xf32> to vector<8x32xf32>
    %238 = arith.negf %237 : vector<8x32xf32>
    %239 = math.exp %238 : vector<8x32xf32>
    %cst_68 = arith.constant 1.000000e+00 : f32
    %240 = vector.broadcast %cst_68 : f32 to vector<8x32xf32>
    %241 = arith.addf %240, %239 : vector<8x32xf32>
    %242 = arith.divf %240, %241 : vector<8x32xf32>
    %243 = vector.extract_strided_slice %236 {offsets = [0, 32], sizes = [8, 32], strides = [1, 1]} : vector<8x128xf32> to vector<8x32xf32>
    %244 = arith.negf %243 : vector<8x32xf32>
    %245 = math.exp %244 : vector<8x32xf32>
    %cst_69 = arith.constant 1.000000e+00 : f32
    %246 = vector.broadcast %cst_69 : f32 to vector<8x32xf32>
    %247 = arith.addf %246, %245 : vector<8x32xf32>
    %248 = arith.divf %246, %247 : vector<8x32xf32>
    %249 = vector.extract_strided_slice %236 {offsets = [0, 64], sizes = [8, 32], strides = [1, 1]} : vector<8x128xf32> to vector<8x32xf32>
    %250 = math.tanh %249 : vector<8x32xf32>
    %251 = vector.extract_strided_slice %236 {offsets = [0, 96], sizes = [8, 32], strides = [1, 1]} : vector<8x128xf32> to vector<8x32xf32>
    %252 = arith.negf %251 : vector<8x32xf32>
    %253 = math.exp %252 : vector<8x32xf32>
    %cst_70 = arith.constant 1.000000e+00 : f32
    %254 = vector.broadcast %cst_70 : f32 to vector<8x32xf32>
    %255 = arith.addf %254, %253 : vector<8x32xf32>
    %256 = arith.divf %254, %255 : vector<8x32xf32>
    %257 = arith.mulf %248, %222 : vector<8x32xf32>
    %258 = arith.mulf %242, %250 : vector<8x32xf32>
    %259 = arith.addf %257, %258 : vector<8x32xf32>
    %260 = math.tanh %259 : vector<8x32xf32>
    %261 = arith.mulf %256, %260 : vector<8x32xf32>
    %262 = arith.index_cast %c6_i32 : i32 to index
    %c0_71 = arith.constant 0 : index
    %c0_72 = arith.constant 0 : index
    %263 = vector.load %arg14[%262, %c0_71, %c0_72] : memref<8x8x32xf32, #tpu.memory_space<vmem>>, vector<1x8x32xf32>
    %264 = vector.shape_cast %263 : vector<1x8x32xf32> to vector<8x32xf32>
    %265 = vector.shape_cast %261 : vector<8x32xf32> to vector<1x8x32xf32>
    tpu.vector_store %arg14[%262, %c0_71, %c0_72], %265 {strides = array<i32>} : memref<8x8x32xf32, #tpu.memory_space<vmem>>, vector<1x8x32xf32>,
    %c7_i32 = arith.constant 7 : i32
    %266 = arith.index_cast %c7_i32 : i32 to index
    %c0_73 = arith.constant 0 : index
    %c0_74 = arith.constant 0 : index
    %267 = vector.load %arg0[%266, %c0_73, %c0_74] : memref<8x8x32xf32, #tpu.memory_space<vmem>>, vector<1x8x32xf32>
    %268 = vector.shape_cast %267 : vector<1x8x32xf32> to vector<8x32xf32>
    %cst_75 = arith.constant dense<0.000000e+00> : vector<8x128xf32>
    %269 = tpu.matmul %268, %0, %cst_75 {dimension_numbers = #tpu.dot_dimension_numbers<[1], [0], [0], [1], [0, 0, 1, 1], [], []>} : vector<8x32xf32>, vector<32x128xf32>, vector<8x128xf32> -> vector<8x128xf32>
    %cst_76 = arith.constant dense<0.000000e+00> : vector<8x128xf32>
    %270 = tpu.matmul %261, %1, %cst_76 {dimension_numbers = #tpu.dot_dimension_numbers<[1], [0], [0], [1], [0, 0, 1, 1], [], []>} : vector<8x32xf32>, vector<32x128xf32>, vector<8x128xf32> -> vector<8x128xf32>
    %271 = arith.addf %269, %270 : vector<8x128xf32>
    %272 = vector.broadcast %2 : vector<1x128xf32> to vector<8x128xf32>
    %273 = arith.addf %271, %272 : vector<8x128xf32>
    %274 = vector.extract_strided_slice %273 {offsets = [0, 0], sizes = [8, 32], strides = [1, 1]} : vector<8x128xf32> to vector<8x32xf32>
    %275 = arith.negf %274 : vector<8x32xf32>
    %276 = math.exp %275 : vector<8x32xf32>
    %cst_77 = arith.constant 1.000000e+00 : f32
    %277 = vector.broadcast %cst_77 : f32 to vector<8x32xf32>
    %278 = arith.addf %277, %276 : vector<8x32xf32>
    %279 = arith.divf %277, %278 : vector<8x32xf32>
    %280 = vector.extract_strided_slice %273 {offsets = [0, 32], sizes = [8, 32], strides = [1, 1]} : vector<8x128xf32> to vector<8x32xf32>
    %281 = arith.negf %280 : vector<8x32xf32>
    %282 = math.exp %281 : vector<8x32xf32>
    %cst_78 = arith.constant 1.000000e+00 : f32
    %283 = vector.broadcast %cst_78 : f32 to vector<8x32xf32>
    %284 = arith.addf %283, %282 : vector<8x32xf32>
    %285 = arith.divf %283, %284 : vector<8x32xf32>
    %286 = vector.extract_strided_slice %273 {offsets = [0, 64], sizes = [8, 32], strides = [1, 1]} : vector<8x128xf32> to vector<8x32xf32>
    %287 = math.tanh %286 : vector<8x32xf32>
    %288 = vector.extract_strided_slice %273 {offsets = [0, 96], sizes = [8, 32], strides = [1, 1]} : vector<8x128xf32> to vector<8x32xf32>
    %289 = arith.negf %288 : vector<8x32xf32>
    %290 = math.exp %289 : vector<8x32xf32>
    %cst_79 = arith.constant 1.000000e+00 : f32
    %291 = vector.broadcast %cst_79 : f32 to vector<8x32xf32>
    %292 = arith.addf %291, %290 : vector<8x32xf32>
    %293 = arith.divf %291, %292 : vector<8x32xf32>
    %294 = arith.mulf %285, %259 : vector<8x32xf32>
    %295 = arith.mulf %279, %287 : vector<8x32xf32>
    %296 = arith.addf %294, %295 : vector<8x32xf32>
    %297 = math.tanh %296 : vector<8x32xf32>
    %298 = arith.mulf %293, %297 : vector<8x32xf32>
    %299 = arith.index_cast %c7_i32 : i32 to index
    %c0_80 = arith.constant 0 : index
    %c0_81 = arith.constant 0 : index
    %300 = vector.load %arg14[%299, %c0_80, %c0_81] : memref<8x8x32xf32, #tpu.memory_space<vmem>>, vector<1x8x32xf32>
    %301 = vector.shape_cast %300 : vector<1x8x32xf32> to vector<8x32xf32>
    %302 = vector.shape_cast %298 : vector<8x32xf32> to vector<1x8x32xf32>
    tpu.vector_store %arg14[%299, %c0_80, %c0_81], %302 {strides = array<i32>} : memref<8x8x32xf32, #tpu.memory_space<vmem>>, vector<1x8x32xf32>,
    %c8_i32 = arith.constant 8 : i32
    %c0_82 = arith.constant 0 : index
    %c0_83 = arith.constant 0 : index
    %c0_84 = arith.constant 0 : index
    %303 = vector.load %arg12[%c0_82, %c0_83, %c0_84] : memref<2x8x32xf32, #tpu.memory_space<vmem>>, vector<1x8x32xf32>
    %304 = vector.shape_cast %303 : vector<1x8x32xf32> to vector<8x32xf32>
    %305 = vector.shape_cast %298 : vector<8x32xf32> to vector<1x8x32xf32>
    tpu.vector_store %arg12[%c0_82, %c0_83, %c0_84], %305 {strides = array<i32>} : memref<2x8x32xf32, #tpu.memory_space<vmem>>, vector<1x8x32xf32>,
    %c0_85 = arith.constant 0 : index
    %c0_86 = arith.constant 0 : index
    %c0_87 = arith.constant 0 : index
    %306 = vector.load %arg13[%c0_85, %c0_86, %c0_87] : memref<2x8x32xf32, #tpu.memory_space<vmem>>, vector<1x8x32xf32>
    %307 = vector.shape_cast %306 : vector<1x8x32xf32> to vector<8x32xf32>
    %308 = vector.shape_cast %296 : vector<8x32xf32> to vector<1x8x32xf32>
    tpu.vector_store %arg13[%c0_85, %c0_86, %c0_87], %308 {strides = array<i32>} : memref<2x8x32xf32, #tpu.memory_space<vmem>>, vector<1x8x32xf32>,
    %c0_88 = arith.constant 0 : index
    %c0_89 = arith.constant 0 : index
    %309 = vector.load %arg6[%c0_88, %c0_89] : memref<32x128xf32, #tpu.memory_space<vmem>>, vector<32x128xf32>
    %c0_90 = arith.constant 0 : index
    %c0_91 = arith.constant 0 : index
    %310 = vector.load %arg7[%c0_90, %c0_91] : memref<32x128xf32, #tpu.memory_space<vmem>>, vector<32x128xf32>
    %c0_92 = arith.constant 0 : index
    %c0_93 = arith.constant 0 : index
    %311 = vector.load %arg8[%c0_92, %c0_93] : memref<1x128xf32, #tpu.memory_space<vmem>>, vector<1x128xf32>
    %c1 = arith.constant 1 : index
    %c0_94 = arith.constant 0 : index
    %c0_95 = arith.constant 0 : index
    %312 = vector.load %arg1[%c1, %c0_94, %c0_95] : memref<2x8x32xf32, #tpu.memory_space<vmem>>, vector<1x8x32xf32>
    %313 = vector.shape_cast %312 : vector<1x8x32xf32> to vector<8x32xf32>
    %c1_96 = arith.constant 1 : index
    %c0_97 = arith.constant 0 : index
    %c0_98 = arith.constant 0 : index
    %314 = vector.load %arg2[%c1_96, %c0_97, %c0_98] : memref<2x8x32xf32, #tpu.memory_space<vmem>>, vector<1x8x32xf32>
    %315 = vector.shape_cast %314 : vector<1x8x32xf32> to vector<8x32xf32>
    %c0_i32_99 = arith.constant 0 : i32
    %316 = arith.index_cast %c0_i32_99 : i32 to index
    %c0_100 = arith.constant 0 : index
    %c0_101 = arith.constant 0 : index
    %317 = vector.load %arg14[%316, %c0_100, %c0_101] : memref<8x8x32xf32, #tpu.memory_space<vmem>>, vector<1x8x32xf32>
    %318 = vector.shape_cast %317 : vector<1x8x32xf32> to vector<8x32xf32>
    %cst_102 = arith.constant dense<0.000000e+00> : vector<8x128xf32>
    %319 = tpu.matmul %318, %309, %cst_102 {dimension_numbers = #tpu.dot_dimension_numbers<[1], [0], [0], [1], [0, 0, 1, 1], [], []>} : vector<8x32xf32>, vector<32x128xf32>, vector<8x128xf32> -> vector<8x128xf32>
    %cst_103 = arith.constant dense<0.000000e+00> : vector<8x128xf32>
    %320 = tpu.matmul %313, %310, %cst_103 {dimension_numbers = #tpu.dot_dimension_numbers<[1], [0], [0], [1], [0, 0, 1, 1], [], []>} : vector<8x32xf32>, vector<32x128xf32>, vector<8x128xf32> -> vector<8x128xf32>
    %321 = arith.addf %319, %320 : vector<8x128xf32>
    %322 = vector.broadcast %311 : vector<1x128xf32> to vector<8x128xf32>
    %323 = arith.addf %321, %322 : vector<8x128xf32>
    %324 = vector.extract_strided_slice %323 {offsets = [0, 0], sizes = [8, 32], strides = [1, 1]} : vector<8x128xf32> to vector<8x32xf32>
    %325 = arith.negf %324 : vector<8x32xf32>
    %326 = math.exp %325 : vector<8x32xf32>
    %cst_104 = arith.constant 1.000000e+00 : f32
    %327 = vector.broadcast %cst_104 : f32 to vector<8x32xf32>
    %328 = arith.addf %327, %326 : vector<8x32xf32>
    %329 = arith.divf %327, %328 : vector<8x32xf32>
    %330 = vector.extract_strided_slice %323 {offsets = [0, 32], sizes = [8, 32], strides = [1, 1]} : vector<8x128xf32> to vector<8x32xf32>
    %331 = arith.negf %330 : vector<8x32xf32>
    %332 = math.exp %331 : vector<8x32xf32>
    %cst_105 = arith.constant 1.000000e+00 : f32
    %333 = vector.broadcast %cst_105 : f32 to vector<8x32xf32>
    %334 = arith.addf %333, %332 : vector<8x32xf32>
    %335 = arith.divf %333, %334 : vector<8x32xf32>
    %336 = vector.extract_strided_slice %323 {offsets = [0, 64], sizes = [8, 32], strides = [1, 1]} : vector<8x128xf32> to vector<8x32xf32>
    %337 = math.tanh %336 : vector<8x32xf32>
    %338 = vector.extract_strided_slice %323 {offsets = [0, 96], sizes = [8, 32], strides = [1, 1]} : vector<8x128xf32> to vector<8x32xf32>
    %339 = arith.negf %338 : vector<8x32xf32>
    %340 = math.exp %339 : vector<8x32xf32>
    %cst_106 = arith.constant 1.000000e+00 : f32
    %341 = vector.broadcast %cst_106 : f32 to vector<8x32xf32>
    %342 = arith.addf %341, %340 : vector<8x32xf32>
    %343 = arith.divf %341, %342 : vector<8x32xf32>
    %344 = arith.mulf %335, %315 : vector<8x32xf32>
    %345 = arith.mulf %329, %337 : vector<8x32xf32>
    %346 = arith.addf %344, %345 : vector<8x32xf32>
    %347 = math.tanh %346 : vector<8x32xf32>
    %348 = arith.mulf %343, %347 : vector<8x32xf32>
    %c1_i32_107 = arith.constant 1 : i32
    %349 = arith.index_cast %c1_i32_107 : i32 to index
    %c0_108 = arith.constant 0 : index
    %c0_109 = arith.constant 0 : index
    %350 = vector.load %arg14[%349, %c0_108, %c0_109] : memref<8x8x32xf32, #tpu.memory_space<vmem>>, vector<1x8x32xf32>
    %351 = vector.shape_cast %350 : vector<1x8x32xf32> to vector<8x32xf32>
    %cst_110 = arith.constant dense<0.000000e+00> : vector<8x128xf32>
    %352 = tpu.matmul %351, %309, %cst_110 {dimension_numbers = #tpu.dot_dimension_numbers<[1], [0], [0], [1], [0, 0, 1, 1], [], []>} : vector<8x32xf32>, vector<32x128xf32>, vector<8x128xf32> -> vector<8x128xf32>
    %cst_111 = arith.constant dense<0.000000e+00> : vector<8x128xf32>
    %353 = tpu.matmul %348, %310, %cst_111 {dimension_numbers = #tpu.dot_dimension_numbers<[1], [0], [0], [1], [0, 0, 1, 1], [], []>} : vector<8x32xf32>, vector<32x128xf32>, vector<8x128xf32> -> vector<8x128xf32>
    %354 = arith.addf %352, %353 : vector<8x128xf32>
    %355 = vector.broadcast %311 : vector<1x128xf32> to vector<8x128xf32>
    %356 = arith.addf %354, %355 : vector<8x128xf32>
    %357 = vector.extract_strided_slice %356 {offsets = [0, 0], sizes = [8, 32], strides = [1, 1]} : vector<8x128xf32> to vector<8x32xf32>
    %358 = arith.negf %357 : vector<8x32xf32>
    %359 = math.exp %358 : vector<8x32xf32>
    %cst_112 = arith.constant 1.000000e+00 : f32
    %360 = vector.broadcast %cst_112 : f32 to vector<8x32xf32>
    %361 = arith.addf %360, %359 : vector<8x32xf32>
    %362 = arith.divf %360, %361 : vector<8x32xf32>
    %363 = vector.extract_strided_slice %356 {offsets = [0, 32], sizes = [8, 32], strides = [1, 1]} : vector<8x128xf32> to vector<8x32xf32>
    %364 = arith.negf %363 : vector<8x32xf32>
    %365 = math.exp %364 : vector<8x32xf32>
    %cst_113 = arith.constant 1.000000e+00 : f32
    %366 = vector.broadcast %cst_113 : f32 to vector<8x32xf32>
    %367 = arith.addf %366, %365 : vector<8x32xf32>
    %368 = arith.divf %366, %367 : vector<8x32xf32>
    %369 = vector.extract_strided_slice %356 {offsets = [0, 64], sizes = [8, 32], strides = [1, 1]} : vector<8x128xf32> to vector<8x32xf32>
    %370 = math.tanh %369 : vector<8x32xf32>
    %371 = vector.extract_strided_slice %356 {offsets = [0, 96], sizes = [8, 32], strides = [1, 1]} : vector<8x128xf32> to vector<8x32xf32>
    %372 = arith.negf %371 : vector<8x32xf32>
    %373 = math.exp %372 : vector<8x32xf32>
    %cst_114 = arith.constant 1.000000e+00 : f32
    %374 = vector.broadcast %cst_114 : f32 to vector<8x32xf32>
    %375 = arith.addf %374, %373 : vector<8x32xf32>
    %376 = arith.divf %374, %375 : vector<8x32xf32>
    %377 = arith.mulf %368, %346 : vector<8x32xf32>
    %378 = arith.mulf %362, %370 : vector<8x32xf32>
    %379 = arith.addf %377, %378 : vector<8x32xf32>
    %380 = math.tanh %379 : vector<8x32xf32>
    %381 = arith.mulf %376, %380 : vector<8x32xf32>
    %c2_i32_115 = arith.constant 2 : i32
    %382 = arith.index_cast %c2_i32_115 : i32 to index
    %c0_116 = arith.constant 0 : index
    %c0_117 = arith.constant 0 : index
    %383 = vector.load %arg14[%382, %c0_116, %c0_117] : memref<8x8x32xf32, #tpu.memory_space<vmem>>, vector<1x8x32xf32>
    %384 = vector.shape_cast %383 : vector<1x8x32xf32> to vector<8x32xf32>
    %cst_118 = arith.constant dense<0.000000e+00> : vector<8x128xf32>
    %385 = tpu.matmul %384, %309, %cst_118 {dimension_numbers = #tpu.dot_dimension_numbers<[1], [0], [0], [1], [0, 0, 1, 1], [], []>} : vector<8x32xf32>, vector<32x128xf32>, vector<8x128xf32> -> vector<8x128xf32>
    %cst_119 = arith.constant dense<0.000000e+00> : vector<8x128xf32>
    %386 = tpu.matmul %381, %310, %cst_119 {dimension_numbers = #tpu.dot_dimension_numbers<[1], [0], [0], [1], [0, 0, 1, 1], [], []>} : vector<8x32xf32>, vector<32x128xf32>, vector<8x128xf32> -> vector<8x128xf32>
    %387 = arith.addf %385, %386 : vector<8x128xf32>
    %388 = vector.broadcast %311 : vector<1x128xf32> to vector<8x128xf32>
    %389 = arith.addf %387, %388 : vector<8x128xf32>
    %390 = vector.extract_strided_slice %389 {offsets = [0, 0], sizes = [8, 32], strides = [1, 1]} : vector<8x128xf32> to vector<8x32xf32>
    %391 = arith.negf %390 : vector<8x32xf32>
    %392 = math.exp %391 : vector<8x32xf32>
    %cst_120 = arith.constant 1.000000e+00 : f32
    %393 = vector.broadcast %cst_120 : f32 to vector<8x32xf32>
    %394 = arith.addf %393, %392 : vector<8x32xf32>
    %395 = arith.divf %393, %394 : vector<8x32xf32>
    %396 = vector.extract_strided_slice %389 {offsets = [0, 32], sizes = [8, 32], strides = [1, 1]} : vector<8x128xf32> to vector<8x32xf32>
    %397 = arith.negf %396 : vector<8x32xf32>
    %398 = math.exp %397 : vector<8x32xf32>
    %cst_121 = arith.constant 1.000000e+00 : f32
    %399 = vector.broadcast %cst_121 : f32 to vector<8x32xf32>
    %400 = arith.addf %399, %398 : vector<8x32xf32>
    %401 = arith.divf %399, %400 : vector<8x32xf32>
    %402 = vector.extract_strided_slice %389 {offsets = [0, 64], sizes = [8, 32], strides = [1, 1]} : vector<8x128xf32> to vector<8x32xf32>
    %403 = math.tanh %402 : vector<8x32xf32>
    %404 = vector.extract_strided_slice %389 {offsets = [0, 96], sizes = [8, 32], strides = [1, 1]} : vector<8x128xf32> to vector<8x32xf32>
    %405 = arith.negf %404 : vector<8x32xf32>
    %406 = math.exp %405 : vector<8x32xf32>
    %cst_122 = arith.constant 1.000000e+00 : f32
    %407 = vector.broadcast %cst_122 : f32 to vector<8x32xf32>
    %408 = arith.addf %407, %406 : vector<8x32xf32>
    %409 = arith.divf %407, %408 : vector<8x32xf32>
    %410 = arith.mulf %401, %379 : vector<8x32xf32>
    %411 = arith.mulf %395, %403 : vector<8x32xf32>
    %412 = arith.addf %410, %411 : vector<8x32xf32>
    %413 = math.tanh %412 : vector<8x32xf32>
    %414 = arith.mulf %409, %413 : vector<8x32xf32>
    %c3_i32_123 = arith.constant 3 : i32
    %415 = arith.index_cast %c3_i32_123 : i32 to index
    %c0_124 = arith.constant 0 : index
    %c0_125 = arith.constant 0 : index
    %416 = vector.load %arg14[%415, %c0_124, %c0_125] : memref<8x8x32xf32, #tpu.memory_space<vmem>>, vector<1x8x32xf32>
    %417 = vector.shape_cast %416 : vector<1x8x32xf32> to vector<8x32xf32>
    %cst_126 = arith.constant dense<0.000000e+00> : vector<8x128xf32>
    %418 = tpu.matmul %417, %309, %cst_126 {dimension_numbers = #tpu.dot_dimension_numbers<[1], [0], [0], [1], [0, 0, 1, 1], [], []>} : vector<8x32xf32>, vector<32x128xf32>, vector<8x128xf32> -> vector<8x128xf32>
    %cst_127 = arith.constant dense<0.000000e+00> : vector<8x128xf32>
    %419 = tpu.matmul %414, %310, %cst_127 {dimension_numbers = #tpu.dot_dimension_numbers<[1], [0], [0], [1], [0, 0, 1, 1], [], []>} : vector<8x32xf32>, vector<32x128xf32>, vector<8x128xf32> -> vector<8x128xf32>
    %420 = arith.addf %418, %419 : vector<8x128xf32>
    %421 = vector.broadcast %311 : vector<1x128xf32> to vector<8x128xf32>
    %422 = arith.addf %420, %421 : vector<8x128xf32>
    %423 = vector.extract_strided_slice %422 {offsets = [0, 0], sizes = [8, 32], strides = [1, 1]} : vector<8x128xf32> to vector<8x32xf32>
    %424 = arith.negf %423 : vector<8x32xf32>
    %425 = math.exp %424 : vector<8x32xf32>
    %cst_128 = arith.constant 1.000000e+00 : f32
    %426 = vector.broadcast %cst_128 : f32 to vector<8x32xf32>
    %427 = arith.addf %426, %425 : vector<8x32xf32>
    %428 = arith.divf %426, %427 : vector<8x32xf32>
    %429 = vector.extract_strided_slice %422 {offsets = [0, 32], sizes = [8, 32], strides = [1, 1]} : vector<8x128xf32> to vector<8x32xf32>
    %430 = arith.negf %429 : vector<8x32xf32>
    %431 = math.exp %430 : vector<8x32xf32>
    %cst_129 = arith.constant 1.000000e+00 : f32
    %432 = vector.broadcast %cst_129 : f32 to vector<8x32xf32>
    %433 = arith.addf %432, %431 : vector<8x32xf32>
    %434 = arith.divf %432, %433 : vector<8x32xf32>
    %435 = vector.extract_strided_slice %422 {offsets = [0, 64], sizes = [8, 32], strides = [1, 1]} : vector<8x128xf32> to vector<8x32xf32>
    %436 = math.tanh %435 : vector<8x32xf32>
    %437 = vector.extract_strided_slice %422 {offsets = [0, 96], sizes = [8, 32], strides = [1, 1]} : vector<8x128xf32> to vector<8x32xf32>
    %438 = arith.negf %437 : vector<8x32xf32>
    %439 = math.exp %438 : vector<8x32xf32>
    %cst_130 = arith.constant 1.000000e+00 : f32
    %440 = vector.broadcast %cst_130 : f32 to vector<8x32xf32>
    %441 = arith.addf %440, %439 : vector<8x32xf32>
    %442 = arith.divf %440, %441 : vector<8x32xf32>
    %443 = arith.mulf %434, %412 : vector<8x32xf32>
    %444 = arith.mulf %428, %436 : vector<8x32xf32>
    %445 = arith.addf %443, %444 : vector<8x32xf32>
    %446 = math.tanh %445 : vector<8x32xf32>
    %447 = arith.mulf %442, %446 : vector<8x32xf32>
    %c4_i32_131 = arith.constant 4 : i32
    %448 = arith.index_cast %c4_i32_131 : i32 to index
    %c0_132 = arith.constant 0 : index
    %c0_133 = arith.constant 0 : index
    %449 = vector.load %arg14[%448, %c0_132, %c0_133] : memref<8x8x32xf32, #tpu.memory_space<vmem>>, vector<1x8x32xf32>
    %450 = vector.shape_cast %449 : vector<1x8x32xf32> to vector<8x32xf32>
    %cst_134 = arith.constant dense<0.000000e+00> : vector<8x128xf32>
    %451 = tpu.matmul %450, %309, %cst_134 {dimension_numbers = #tpu.dot_dimension_numbers<[1], [0], [0], [1], [0, 0, 1, 1], [], []>} : vector<8x32xf32>, vector<32x128xf32>, vector<8x128xf32> -> vector<8x128xf32>
    %cst_135 = arith.constant dense<0.000000e+00> : vector<8x128xf32>
    %452 = tpu.matmul %447, %310, %cst_135 {dimension_numbers = #tpu.dot_dimension_numbers<[1], [0], [0], [1], [0, 0, 1, 1], [], []>} : vector<8x32xf32>, vector<32x128xf32>, vector<8x128xf32> -> vector<8x128xf32>
    %453 = arith.addf %451, %452 : vector<8x128xf32>
    %454 = vector.broadcast %311 : vector<1x128xf32> to vector<8x128xf32>
    %455 = arith.addf %453, %454 : vector<8x128xf32>
    %456 = vector.extract_strided_slice %455 {offsets = [0, 0], sizes = [8, 32], strides = [1, 1]} : vector<8x128xf32> to vector<8x32xf32>
    %457 = arith.negf %456 : vector<8x32xf32>
    %458 = math.exp %457 : vector<8x32xf32>
    %cst_136 = arith.constant 1.000000e+00 : f32
    %459 = vector.broadcast %cst_136 : f32 to vector<8x32xf32>
    %460 = arith.addf %459, %458 : vector<8x32xf32>
    %461 = arith.divf %459, %460 : vector<8x32xf32>
    %462 = vector.extract_strided_slice %455 {offsets = [0, 32], sizes = [8, 32], strides = [1, 1]} : vector<8x128xf32> to vector<8x32xf32>
    %463 = arith.negf %462 : vector<8x32xf32>
    %464 = math.exp %463 : vector<8x32xf32>
    %cst_137 = arith.constant 1.000000e+00 : f32
    %465 = vector.broadcast %cst_137 : f32 to vector<8x32xf32>
    %466 = arith.addf %465, %464 : vector<8x32xf32>
    %467 = arith.divf %465, %466 : vector<8x32xf32>
    %468 = vector.extract_strided_slice %455 {offsets = [0, 64], sizes = [8, 32], strides = [1, 1]} : vector<8x128xf32> to vector<8x32xf32>
    %469 = math.tanh %468 : vector<8x32xf32>
    %470 = vector.extract_strided_slice %455 {offsets = [0, 96], sizes = [8, 32], strides = [1, 1]} : vector<8x128xf32> to vector<8x32xf32>
    %471 = arith.negf %470 : vector<8x32xf32>
    %472 = math.exp %471 : vector<8x32xf32>
    %cst_138 = arith.constant 1.000000e+00 : f32
    %473 = vector.broadcast %cst_138 : f32 to vector<8x32xf32>
    %474 = arith.addf %473, %472 : vector<8x32xf32>
    %475 = arith.divf %473, %474 : vector<8x32xf32>
    %476 = arith.mulf %467, %445 : vector<8x32xf32>
    %477 = arith.mulf %461, %469 : vector<8x32xf32>
    %478 = arith.addf %476, %477 : vector<8x32xf32>
    %479 = math.tanh %478 : vector<8x32xf32>
    %480 = arith.mulf %475, %479 : vector<8x32xf32>
    %c5_i32_139 = arith.constant 5 : i32
    %481 = arith.index_cast %c5_i32_139 : i32 to index
    %c0_140 = arith.constant 0 : index
    %c0_141 = arith.constant 0 : index
    %482 = vector.load %arg14[%481, %c0_140, %c0_141] : memref<8x8x32xf32, #tpu.memory_space<vmem>>, vector<1x8x32xf32>
    %483 = vector.shape_cast %482 : vector<1x8x32xf32> to vector<8x32xf32>
    %cst_142 = arith.constant dense<0.000000e+00> : vector<8x128xf32>
    %484 = tpu.matmul %483, %309, %cst_142 {dimension_numbers = #tpu.dot_dimension_numbers<[1], [0], [0], [1], [0, 0, 1, 1], [], []>} : vector<8x32xf32>, vector<32x128xf32>, vector<8x128xf32> -> vector<8x128xf32>
    %cst_143 = arith.constant dense<0.000000e+00> : vector<8x128xf32>
    %485 = tpu.matmul %480, %310, %cst_143 {dimension_numbers = #tpu.dot_dimension_numbers<[1], [0], [0], [1], [0, 0, 1, 1], [], []>} : vector<8x32xf32>, vector<32x128xf32>, vector<8x128xf32> -> vector<8x128xf32>
    %486 = arith.addf %484, %485 : vector<8x128xf32>
    %487 = vector.broadcast %311 : vector<1x128xf32> to vector<8x128xf32>
    %488 = arith.addf %486, %487 : vector<8x128xf32>
    %489 = vector.extract_strided_slice %488 {offsets = [0, 0], sizes = [8, 32], strides = [1, 1]} : vector<8x128xf32> to vector<8x32xf32>
    %490 = arith.negf %489 : vector<8x32xf32>
    %491 = math.exp %490 : vector<8x32xf32>
    %cst_144 = arith.constant 1.000000e+00 : f32
    %492 = vector.broadcast %cst_144 : f32 to vector<8x32xf32>
    %493 = arith.addf %492, %491 : vector<8x32xf32>
    %494 = arith.divf %492, %493 : vector<8x32xf32>
    %495 = vector.extract_strided_slice %488 {offsets = [0, 32], sizes = [8, 32], strides = [1, 1]} : vector<8x128xf32> to vector<8x32xf32>
    %496 = arith.negf %495 : vector<8x32xf32>
    %497 = math.exp %496 : vector<8x32xf32>
    %cst_145 = arith.constant 1.000000e+00 : f32
    %498 = vector.broadcast %cst_145 : f32 to vector<8x32xf32>
    %499 = arith.addf %498, %497 : vector<8x32xf32>
    %500 = arith.divf %498, %499 : vector<8x32xf32>
    %501 = vector.extract_strided_slice %488 {offsets = [0, 64], sizes = [8, 32], strides = [1, 1]} : vector<8x128xf32> to vector<8x32xf32>
    %502 = math.tanh %501 : vector<8x32xf32>
    %503 = vector.extract_strided_slice %488 {offsets = [0, 96], sizes = [8, 32], strides = [1, 1]} : vector<8x128xf32> to vector<8x32xf32>
    %504 = arith.negf %503 : vector<8x32xf32>
    %505 = math.exp %504 : vector<8x32xf32>
    %cst_146 = arith.constant 1.000000e+00 : f32
    %506 = vector.broadcast %cst_146 : f32 to vector<8x32xf32>
    %507 = arith.addf %506, %505 : vector<8x32xf32>
    %508 = arith.divf %506, %507 : vector<8x32xf32>
    %509 = arith.mulf %500, %478 : vector<8x32xf32>
    %510 = arith.mulf %494, %502 : vector<8x32xf32>
    %511 = arith.addf %509, %510 : vector<8x32xf32>
    %512 = math.tanh %511 : vector<8x32xf32>
    %513 = arith.mulf %508, %512 : vector<8x32xf32>
    %c6_i32_147 = arith.constant 6 : i32
    %514 = arith.index_cast %c6_i32_147 : i32 to index
    %c0_148 = arith.constant 0 : index
    %c0_149 = arith.constant 0 : index
    %515 = vector.load %arg14[%514, %c0_148, %c0_149] : memref<8x8x32xf32, #tpu.memory_space<vmem>>, vector<1x8x32xf32>
    %516 = vector.shape_cast %515 : vector<1x8x32xf32> to vector<8x32xf32>
    %cst_150 = arith.constant dense<0.000000e+00> : vector<8x128xf32>
    %517 = tpu.matmul %516, %309, %cst_150 {dimension_numbers = #tpu.dot_dimension_numbers<[1], [0], [0], [1], [0, 0, 1, 1], [], []>} : vector<8x32xf32>, vector<32x128xf32>, vector<8x128xf32> -> vector<8x128xf32>
    %cst_151 = arith.constant dense<0.000000e+00> : vector<8x128xf32>
    %518 = tpu.matmul %513, %310, %cst_151 {dimension_numbers = #tpu.dot_dimension_numbers<[1], [0], [0], [1], [0, 0, 1, 1], [], []>} : vector<8x32xf32>, vector<32x128xf32>, vector<8x128xf32> -> vector<8x128xf32>
    %519 = arith.addf %517, %518 : vector<8x128xf32>
    %520 = vector.broadcast %311 : vector<1x128xf32> to vector<8x128xf32>
    %521 = arith.addf %519, %520 : vector<8x128xf32>
    %522 = vector.extract_strided_slice %521 {offsets = [0, 0], sizes = [8, 32], strides = [1, 1]} : vector<8x128xf32> to vector<8x32xf32>
    %523 = arith.negf %522 : vector<8x32xf32>
    %524 = math.exp %523 : vector<8x32xf32>
    %cst_152 = arith.constant 1.000000e+00 : f32
    %525 = vector.broadcast %cst_152 : f32 to vector<8x32xf32>
    %526 = arith.addf %525, %524 : vector<8x32xf32>
    %527 = arith.divf %525, %526 : vector<8x32xf32>
    %528 = vector.extract_strided_slice %521 {offsets = [0, 32], sizes = [8, 32], strides = [1, 1]} : vector<8x128xf32> to vector<8x32xf32>
    %529 = arith.negf %528 : vector<8x32xf32>
    %530 = math.exp %529 : vector<8x32xf32>
    %cst_153 = arith.constant 1.000000e+00 : f32
    %531 = vector.broadcast %cst_153 : f32 to vector<8x32xf32>
    %532 = arith.addf %531, %530 : vector<8x32xf32>
    %533 = arith.divf %531, %532 : vector<8x32xf32>
    %534 = vector.extract_strided_slice %521 {offsets = [0, 64], sizes = [8, 32], strides = [1, 1]} : vector<8x128xf32> to vector<8x32xf32>
    %535 = math.tanh %534 : vector<8x32xf32>
    %536 = vector.extract_strided_slice %521 {offsets = [0, 96], sizes = [8, 32], strides = [1, 1]} : vector<8x128xf32> to vector<8x32xf32>
    %537 = arith.negf %536 : vector<8x32xf32>
    %538 = math.exp %537 : vector<8x32xf32>
    %cst_154 = arith.constant 1.000000e+00 : f32
    %539 = vector.broadcast %cst_154 : f32 to vector<8x32xf32>
    %540 = arith.addf %539, %538 : vector<8x32xf32>
    %541 = arith.divf %539, %540 : vector<8x32xf32>
    %542 = arith.mulf %533, %511 : vector<8x32xf32>
    %543 = arith.mulf %527, %535 : vector<8x32xf32>
    %544 = arith.addf %542, %543 : vector<8x32xf32>
    %545 = math.tanh %544 : vector<8x32xf32>
    %546 = arith.mulf %541, %545 : vector<8x32xf32>
    %c7_i32_155 = arith.constant 7 : i32
    %547 = arith.index_cast %c7_i32_155 : i32 to index
    %c0_156 = arith.constant 0 : index
    %c0_157 = arith.constant 0 : index
    %548 = vector.load %arg14[%547, %c0_156, %c0_157] : memref<8x8x32xf32, #tpu.memory_space<vmem>>, vector<1x8x32xf32>
    %549 = vector.shape_cast %548 : vector<1x8x32xf32> to vector<8x32xf32>
    %cst_158 = arith.constant dense<0.000000e+00> : vector<8x128xf32>
    %550 = tpu.matmul %549, %309, %cst_158 {dimension_numbers = #tpu.dot_dimension_numbers<[1], [0], [0], [1], [0, 0, 1, 1], [], []>} : vector<8x32xf32>, vector<32x128xf32>, vector<8x128xf32> -> vector<8x128xf32>
    %cst_159 = arith.constant dense<0.000000e+00> : vector<8x128xf32>
    %551 = tpu.matmul %546, %310, %cst_159 {dimension_numbers = #tpu.dot_dimension_numbers<[1], [0], [0], [1], [0, 0, 1, 1], [], []>} : vector<8x32xf32>, vector<32x128xf32>, vector<8x128xf32> -> vector<8x128xf32>
    %552 = arith.addf %550, %551 : vector<8x128xf32>
    %553 = vector.broadcast %311 : vector<1x128xf32> to vector<8x128xf32>
    %554 = arith.addf %552, %553 : vector<8x128xf32>
    %555 = vector.extract_strided_slice %554 {offsets = [0, 0], sizes = [8, 32], strides = [1, 1]} : vector<8x128xf32> to vector<8x32xf32>
    %556 = arith.negf %555 : vector<8x32xf32>
    %557 = math.exp %556 : vector<8x32xf32>
    %cst_160 = arith.constant 1.000000e+00 : f32
    %558 = vector.broadcast %cst_160 : f32 to vector<8x32xf32>
    %559 = arith.addf %558, %557 : vector<8x32xf32>
    %560 = arith.divf %558, %559 : vector<8x32xf32>
    %561 = vector.extract_strided_slice %554 {offsets = [0, 32], sizes = [8, 32], strides = [1, 1]} : vector<8x128xf32> to vector<8x32xf32>
    %562 = arith.negf %561 : vector<8x32xf32>
    %563 = math.exp %562 : vector<8x32xf32>
    %cst_161 = arith.constant 1.000000e+00 : f32
    %564 = vector.broadcast %cst_161 : f32 to vector<8x32xf32>
    %565 = arith.addf %564, %563 : vector<8x32xf32>
    %566 = arith.divf %564, %565 : vector<8x32xf32>
    %567 = vector.extract_strided_slice %554 {offsets = [0, 64], sizes = [8, 32], strides = [1, 1]} : vector<8x128xf32> to vector<8x32xf32>
    %568 = math.tanh %567 : vector<8x32xf32>
    %569 = vector.extract_strided_slice %554 {offsets = [0, 96], sizes = [8, 32], strides = [1, 1]} : vector<8x128xf32> to vector<8x32xf32>
    %570 = arith.negf %569 : vector<8x32xf32>
    %571 = math.exp %570 : vector<8x32xf32>
    %cst_162 = arith.constant 1.000000e+00 : f32
    %572 = vector.broadcast %cst_162 : f32 to vector<8x32xf32>
    %573 = arith.addf %572, %571 : vector<8x32xf32>
    %574 = arith.divf %572, %573 : vector<8x32xf32>
    %575 = arith.mulf %566, %544 : vector<8x32xf32>
    %576 = arith.mulf %560, %568 : vector<8x32xf32>
    %577 = arith.addf %575, %576 : vector<8x32xf32>
    %578 = math.tanh %577 : vector<8x32xf32>
    %579 = arith.mulf %574, %578 : vector<8x32xf32>
    %c8_i32_163 = arith.constant 8 : i32
    %c1_164 = arith.constant 1 : index
    %c0_165 = arith.constant 0 : index
    %c0_166 = arith.constant 0 : index
    %580 = vector.load %arg12[%c1_164, %c0_165, %c0_166] : memref<2x8x32xf32, #tpu.memory_space<vmem>>, vector<1x8x32xf32>
    %581 = vector.shape_cast %580 : vector<1x8x32xf32> to vector<8x32xf32>
    %582 = vector.shape_cast %579 : vector<8x32xf32> to vector<1x8x32xf32>
    tpu.vector_store %arg12[%c1_164, %c0_165, %c0_166], %582 {strides = array<i32>} : memref<2x8x32xf32, #tpu.memory_space<vmem>>, vector<1x8x32xf32>,
    %c1_167 = arith.constant 1 : index
    %c0_168 = arith.constant 0 : index
    %c0_169 = arith.constant 0 : index
    %583 = vector.load %arg13[%c1_167, %c0_168, %c0_169] : memref<2x8x32xf32, #tpu.memory_space<vmem>>, vector<1x8x32xf32>
    %584 = vector.shape_cast %583 : vector<1x8x32xf32> to vector<8x32xf32>
    %585 = vector.shape_cast %577 : vector<8x32xf32> to vector<1x8x32xf32>
    tpu.vector_store %arg13[%c1_167, %c0_168, %c0_169], %585 {strides = array<i32>} : memref<2x8x32xf32, #tpu.memory_space<vmem>>, vector<1x8x32xf32>,
    %c0_170 = arith.constant 0 : index
    %c0_171 = arith.constant 0 : index
    %586 = vector.load %arg9[%c0_170, %c0_171] : memref<32x1xf32, #tpu.memory_space<vmem>>, vector<32x1xf32>
    %cst_172 = arith.constant dense<0.000000e+00> : vector<8x1xf32>
    %587 = tpu.matmul %579, %586, %cst_172 {dimension_numbers = #tpu.dot_dimension_numbers<[1], [0], [0], [1], [0, 0, 1, 1], [], []>} : vector<8x32xf32>, vector<32x1xf32>, vector<8x1xf32> -> vector<8x1xf32>
    %c0_173 = arith.constant 0 : index
    %c0_174 = arith.constant 0 : index
    %588 = vector.load %arg10[%c0_173, %c0_174] : memref<1x1xf32, #tpu.memory_space<vmem>>, vector<1x1xf32>
    %589 = vector.broadcast %588 : vector<1x1xf32> to vector<8x1xf32>
    %590 = arith.addf %587, %589 : vector<8x1xf32>
    %591 = arith.negf %590 : vector<8x1xf32>
    %592 = math.exp %591 : vector<8x1xf32>
    %cst_175 = arith.constant 1.000000e+00 : f32
    %593 = vector.broadcast %cst_175 : f32 to vector<8x1xf32>
    %594 = arith.addf %593, %592 : vector<8x1xf32>
    %595 = arith.divf %593, %594 : vector<8x1xf32>
    %c0_176 = arith.constant 0 : index
    %c0_177 = arith.constant 0 : index
    %596 = vector.load %arg11[%c0_176, %c0_177] : memref<8x1xf32, #tpu.memory_space<vmem>>, vector<8x1xf32>
    tpu.vector_store %arg11[%c0_176, %c0_177], %595 {strides = array<i32>} : memref<8x1xf32, #tpu.memory_space<vmem>>, vector<8x1xf32>,
    return
  }
}

</mosaic_0001>

<llo_original>
// kernel: tpu_custom_call.1
$region0: #{tpu_custom_call.1}
  #allocation0 [shape = 'u32[]', space=smem, size = 0x4, offset = 0x4, fixed_abs, tag = 'smem constant byte address 0x4 - core index']
  #allocation1 [shape = 'u32[72,128]{1,0:T(1,128)}', space=vmem, size = 0x9000, scoped, tag = 'internal scratch']
  #allocation2 [shape = 'f32[8,8,32]{2,1,0:T(8,128)}', space=vmem, size = 0x8000, scoped, tag = 'scratch operand']
  #allocation3 [shape = 'f32[1,1]{1,0:T(1,128)S(1)}', space=vmem, size = 0x200, scoped, tag = 'scoped memory for tpu_custom_call.1']
  %s0 = inlined_call_operand.hbm [shape: f32[8,8,32], index: 0, kind: input, shape index: {}]
  %s1 = inlined_call_operand.hbm [shape: f32[2,8,32], index: 1, kind: input, shape index: {}]
  %s2 = inlined_call_operand.hbm [shape: f32[2,8,32], index: 2, kind: input, shape index: {}]
  %s3 = inlined_call_operand.vmem [shape: f32[32,128], index: 3, kind: input, shape index: {}]
  %s4 = inlined_call_operand.hbm [shape: f32[32,128], index: 4, kind: input, shape index: {}]
  %s5 = inlined_call_operand.vmem [shape: f32[1,128], index: 5, kind: input, shape index: {}]
  %s6 = inlined_call_operand.hbm [shape: f32[32,128], index: 6, kind: input, shape index: {}]
  %s7 = inlined_call_operand.hbm [shape: f32[32,128], index: 7, kind: input, shape index: {}]
  %s8 = inlined_call_operand.vmem [shape: f32[1,128], index: 8, kind: input, shape index: {}]
  %s9 = inlined_call_operand.vmem [shape: f32[32,1], index: 9, kind: input, shape index: {}]
  %s10 = inlined_call_operand.<no memory space> [shape: f32[1,1], index: 10, kind: input, shape index: {}]
  %s11 = inlined_call_operand.vmem [shape: f32[8,1], index: 11, kind: output, shape index: {0}]
  %s12 = inlined_call_operand.hbm [shape: f32[2,8,32], index: 12, kind: output, shape index: {1}]
  %s13 = inlined_call_operand.hbm [shape: f32[2,8,32], index: 13, kind: output, shape index: {2}]
  %14 = xla_tuple %s11, %s12, %s13
  %s15 = sld [smem:[#allocation0]]
  $region94: #{tpu_custom_call.1} parent=0
    _
  %s17 = ssub.s32 1, %s15
  %s18 = scalar_select 0, %s17, %s15
  %v19 = vstv %s10
  %20 = vst [vmem:[#allocation3] sm:$0x1] %v19
  $region1: #{tpu_custom_call.1} parent=0
    #allocation4 [shape = 'u8[32768]{0}', space=vmem, size = 0x8000, scoped, tag = 'input window, operand 0, single buffered']
    #allocation5 [shape = 's32[1]{0}', space=sflag, size = 0x4, scoped, tag = 'scoped memory for tpu_custom_call.1']
    #allocation6 [shape = 's32[1]{0}', space=sflag, size = 0x4, scoped, tag = 'scoped memory for tpu_custom_call.1']
    #allocation7 [shape = 'u8[8192]{0}', space=vmem, size = 0x2000, scoped, tag = 'input window, operand 1, single buffered']
    #allocation8 [shape = 's32[1]{0}', space=sflag, size = 0x4, scoped, tag = 'scoped memory for tpu_custom_call.1']
    #allocation9 [shape = 'u8[8192]{0}', space=vmem, size = 0x2000, scoped, tag = 'input window, operand 2, single buffered']
    #allocation10 [shape = 'u8[16384]{0}', space=vmem, size = 0x4000, scoped, tag = 'input window, operand 4, single buffered']
    #allocation11 [shape = 's32[1]{0}', space=sflag, size = 0x4, scoped, tag = 'scoped memory for tpu_custom_call.1']
    #allocation12 [shape = 'u8[16384]{0}', space=vmem, size = 0x4000, scoped, tag = 'input window, operand 6, single buffered']
    #allocation13 [shape = 'u8[16384]{0}', space=vmem, size = 0x4000, scoped, tag = 'input window, operand 7, single buffered']
    #allocation14 [shape = 's32[1]{0}', space=sflag, size = 0x4, scoped, tag = 'scoped memory for tpu_custom_call.1']
    #allocation15 [shape = 'u8[8192]{0}', space=vmem, size = 0x2000, scoped, tag = 'output window, operand 1, single buffered']
    #allocation16 [shape = 'u8[8192]{0}', space=vmem, size = 0x2000, scoped, tag = 'output window, operand 2, single buffered']
    #allocation17 [shape = 's32[1]{0}', space=sflag, size = 0x4, scoped, tag = 'scoped memory for tpu_custom_call.1']
    %21 = vsyncpa [#allocation5], 0
    %22 = vsyncpa [#allocation8], 0
    %23 = vsyncpa [#allocation11], 0
    %24 = vsyncpa [#allocation14], 0
    %25 = vsyncpa [#allocation6], 0
    %26 = vsyncpa [#allocation17], 0
    // Predicated region
    $region2: #{tpu_custom_call.1} parent=1 // pred_check
      _
    $region3: #{tpu_custom_call.1} parent=1 // pred_check_branch
      %28 = sbr.rel (0) target = $region5
    $region4: #{tpu_custom_call.1} parent=1 // pred_region
      %30 = vsyncadd [#allocation5], 0
      %s31 = sshll.u32 %s0, 4
      %s32 = int_to_ptr.hbm [resolvable:$true] %s31
      %s33 = sshll.u32 [#allocation4], 4
      %s34 = int_to_ptr.vmem [resolvable:$true] %s33
      %39 = dma.hbm_to_vmem [thread:$0]  %s32, 1024, %s34, [#allocation5], 128, 128, 8
    $region5: #{tpu_custom_call.1} parent=1 // pred_fallthru
      _
    // Predicated region
    $region6: #{tpu_custom_call.1} parent=1 // pred_check
      _
    $region7: #{tpu_custom_call.1} parent=1 // pred_check_branch
      %41 = sbr.rel (0) target = $region9
    $region8: #{tpu_custom_call.1} parent=1 // pred_region
      %43 = vsyncadd [#allocation8], 0
      %s44 = sshll.u32 %s1, 4
      %s45 = int_to_ptr.hbm [resolvable:$true] %s44
      %s46 = sshll.u32 [#allocation7], 4
      %s47 = int_to_ptr.vmem [resolvable:$true] %s46
      %52 = dma.hbm_to_vmem [thread:$0]  %s45, 256, %s47, [#allocation8], 128, 128, 8
    $region9: #{tpu_custom_call.1} parent=1 // pred_fallthru
      _
    // Predicated region
    $region10: #{tpu_custom_call.1} parent=1 // pred_check
      _
    $region11: #{tpu_custom_call.1} parent=1 // pred_check_branch
      %54 = sbr.rel (0) target = $region13
    $region12: #{tpu_custom_call.1} parent=1 // pred_region
      %56 = vsyncadd [#allocation8], 0
      %s57 = sshll.u32 %s2, 4
      %s58 = int_to_ptr.hbm [resolvable:$true] %s57
      %s59 = sshll.u32 [#allocation9], 4
      %s60 = int_to_ptr.vmem [resolvable:$true] %s59
      %65 = dma.hbm_to_vmem [thread:$0]  %s58, 256, %s60, [#allocation8], 128, 128, 8
    $region13: #{tpu_custom_call.1} parent=1 // pred_fallthru
      _
    // Predicated region
    $region14: #{tpu_custom_call.1} parent=1 // pred_check
      _
    $region15: #{tpu_custom_call.1} parent=1 // pred_check_branch
      %67 = sbr.rel (0) target = $region17
    $region16: #{tpu_custom_call.1} parent=1 // pred_region
      _
    $region17: #{tpu_custom_call.1} parent=1 // pred_fallthru
      _
    // Predicated region
    $region18: #{tpu_custom_call.1} parent=1 // pred_check
      _
    $region19: #{tpu_custom_call.1} parent=1 // pred_check_branch
      %69 = sbr.rel (0) target = $region21
    $region20: #{tpu_custom_call.1} parent=1 // pred_region
      %71 = vsyncadd [#allocation11], 0
      %s72 = sshll.u32 %s4, 4
      %s73 = int_to_ptr.hbm [resolvable:$true] %s72
      %s74 = sshll.u32 [#allocation10], 4
      %s75 = int_to_ptr.vmem [resolvable:$true] %s74
      %80 = dma.hbm_to_vmem [thread:$0]  %s73, 512, %s75, [#allocation11], 128, 128, 8
    $region21: #{tpu_custom_call.1} parent=1 // pred_fallthru
      _
    // Predicated region
    $region22: #{tpu_custom_call.1} parent=1 // pred_check
      _
    $region23: #{tpu_custom_call.1} parent=1 // pred_check_branch
      %82 = sbr.rel (0) target = $region25
    $region24: #{tpu_custom_call.1} parent=1 // pred_region
      _
    $region25: #{tpu_custom_call.1} parent=1 // pred_fallthru
      _
    // Predicated region
    $region26: #{tpu_custom_call.1} parent=1 // pred_check
      _
    $region27: #{tpu_custom_call.1} parent=1 // pred_check_branch
      %84 = sbr.rel (0) target = $region29
    $region28: #{tpu_custom_call.1} parent=1 // pred_region
      %86 = vsyncadd [#allocation11], 0
      %s87 = sshll.u32 %s6, 4
      %s88 = int_to_ptr.hbm [resolvable:$true] %s87
      %s89 = sshll.u32 [#allocation12], 4
      %s90 = int_to_ptr.vmem [resolvable:$true] %s89
      %95 = dma.hbm_to_vmem [thread:$0]  %s88, 512, %s90, [#allocation11], 128, 128, 8
    $region29: #{tpu_custom_call.1} parent=1 // pred_fallthru
      _
    // Predicated region
    $region30: #{tpu_custom_call.1} parent=1 // pred_check
      _
    $region31: #{tpu_custom_call.1} parent=1 // pred_check_branch
      %97 = sbr.rel (0) target = $region33
    $region32: #{tpu_custom_call.1} parent=1 // pred_region
      %99 = vsyncadd [#allocation14], 0
      %s100 = sshll.u32 %s7, 4
      %s101 = int_to_ptr.hbm [resolvable:$true] %s100
      %s102 = sshll.u32 [#allocation13], 4
      %s103 = int_to_ptr.vmem [resolvable:$true] %s102
      %108 = dma.hbm_to_vmem [thread:$0]  %s101, 512, %s103, [#allocation14], 128, 128, 8
    $region33: #{tpu_custom_call.1} parent=1 // pred_fallthru
      _
    // Predicated region
    $region34: #{tpu_custom_call.1} parent=1 // pred_check
      _
    $region35: #{tpu_custom_call.1} parent=1 // pred_check_branch
      %110 = sbr.rel (0) target = $region37
    $region36: #{tpu_custom_call.1} parent=1 // pred_region
      _
    $region37: #{tpu_custom_call.1} parent=1 // pred_fallthru
      _
    // Predicated region
    $region38: #{tpu_custom_call.1} parent=1 // pred_check
      _
    $region39: #{tpu_custom_call.1} parent=1 // pred_check_branch
      %112 = sbr.rel (0) target = $region41
    $region40: #{tpu_custom_call.1} parent=1 // pred_region
      _
    $region41: #{tpu_custom_call.1} parent=1 // pred_fallthru
      _
    // Predicated region
    $region42: #{tpu_custom_call.1} parent=1 // pred_check
      _
    $region43: #{tpu_custom_call.1} parent=1 // pred_check_branch
      %114 = sbr.rel (0) target = $region45
    $region44: #{tpu_custom_call.1} parent=1 // pred_region
      _
    $region45: #{tpu_custom_call.1} parent=1 // pred_fallthru
      _
    // Predicated region
    $region46: #{tpu_custom_call.1} parent=1 // pred_check
      _
    $region47: #{tpu_custom_call.1} parent=1 // pred_check_branch
      %116 = sbr.rel (0) target = $region49
    $region48: #{tpu_custom_call.1} parent=1 // pred_region
      %118 = dma.done [#allocation5], 1024
    $region49: #{tpu_custom_call.1} parent=1 // pred_fallthru
      _
    // Predicated region
    $region50: #{tpu_custom_call.1} parent=1 // pred_check
      _
    $region51: #{tpu_custom_call.1} parent=1 // pred_check_branch
      %120 = sbr.rel (0) target = $region53
    $region52: #{tpu_custom_call.1} parent=1 // pred_region
      %122 = dma.done [#allocation8], 256
    $region53: #{tpu_custom_call.1} parent=1 // pred_fallthru
      _
    // Predicated region
    $region54: #{tpu_custom_call.1} parent=1 // pred_check
      _
    $region55: #{tpu_custom_call.1} parent=1 // pred_check_branch
      %124 = sbr.rel (0) target = $region57
    $region56: #{tpu_custom_call.1} parent=1 // pred_region
      %126 = dma.done [#allocation8], 256
    $region57: #{tpu_custom_call.1} parent=1 // pred_fallthru
      _
    // Predicated region
    $region58: #{tpu_custom_call.1} parent=1 // pred_check
      _
    $region59: #{tpu_custom_call.1} parent=1 // pred_check_branch
      %128 = sbr.rel (0) target = $region61
    $region60: #{tpu_custom_call.1} parent=1 // pred_region
      %130 = dma.done [#allocation11], 512
    $region61: #{tpu_custom_call.1} parent=1 // pred_fallthru
      _
    // Predicated region
    $region62: #{tpu_custom_call.1} parent=1 // pred_check
      _
    $region63: #{tpu_custom_call.1} parent=1 // pred_check_branch
      %132 = sbr.rel (0) target = $region65
    $region64: #{tpu_custom_call.1} parent=1 // pred_region
      %134 = dma.done [#allocation11], 512
    $region65: #{tpu_custom_call.1} parent=1 // pred_fallthru
      _
    // Predicated region
    $region66: #{tpu_custom_call.1} parent=1 // pred_check
      _
    $region67: #{tpu_custom_call.1} parent=1 // pred_check_branch
      %136 = sbr.rel (0) target = $region69
    $region68: #{tpu_custom_call.1} parent=1 // pred_region
      %138 = dma.done [#allocation14], 512
    $region69: #{tpu_custom_call.1} parent=1 // pred_fallthru
      _
    %v139 = vld [vmem:[%s3] sm:$0xff]
    %v140 = vld [vmem:[%s3 + $0x8] sm:$0xff]
    %v141 = vld [vmem:[%s3 + $0x10] sm:$0xff]
    %v142 = vld [vmem:[%s3 + $0x18] sm:$0xff]
    %v143 = vld [vmem:[#allocation10] sm:$0xff]
    %v144 = vld [vmem:[#allocation10 + $0x8] sm:$0xff]
    %v145 = vld [vmem:[#allocation10 + $0x10] sm:$0xff]
    %v146 = vld [vmem:[#allocation10 + $0x18] sm:$0xff]
    %v147 = vld [vmem:[%s5] sm:$0x1]
    %v148 = vld [vmem:[#allocation7] sm:$0xff]
    %v149 = vld [vmem:[#allocation9] sm:$0xff]
    %v150 = vld [vmem:[#allocation4] sm:$0xff]
    %vm151 = vcmask 261120
    %v153 = vsel %vm151, %v148, 0
    %155 = vmatpush.msra.mxu0 0.0
    %156 = vmatpush.msra.mxu0 0.0
    %157 = vmatpush.msra.mxu0 0.0
    %158 = vmatpush.msra.mxu0 0.0
    %159 = vmatpush.msra.mxu0 0.0
    %160 = vmatpush.msra.mxu0 0.0
    %161 = vmatpush.msra.mxu0 0.0
    %162 = vmatpush.msra.mxu0 0.0
    %163 = vmatpush.msra.mxu0 0.0
    %164 = vmatpush.msra.mxu0 0.0
    %165 = vmatpush.msra.mxu0 0.0
    %166 = vmatpush.msra.mxu0 0.0
    %167 = vmatpush.msra.mxu0 %v146
    %168 = vmatpush.msra.mxu0 %v145
    %169 = vmatpush.msra.mxu0 %v144
    %170 = vmatpush.msra.mxu0 %v143
    %171 = vmatmul.f32.gmra.mxu0 %v153
    %v172 = vpop.f32.mrf.mxu0
    %v173 = vadd.f32 0.0, %v172
    %174 = vdwg.mxu0
    %v176 = vsel %vm151, %v150, 0
    %178 = vmatpush.msra.mxu0 0.0
    %179 = vmatpush.msra.mxu0 0.0
    %180 = vmatpush.msra.mxu0 0.0
    %181 = vmatpush.msra.mxu0 0.0
    %182 = vmatpush.msra.mxu0 0.0
    %183 = vmatpush.msra.mxu0 0.0
    %184 = vmatpush.msra.mxu0 0.0
    %185 = vmatpush.msra.mxu0 0.0
    %186 = vmatpush.msra.mxu0 0.0
    %187 = vmatpush.msra.mxu0 0.0
    %188 = vmatpush.msra.mxu0 0.0
    %189 = vmatpush.msra.mxu0 0.0
    %190 = vmatpush.msra.mxu0 %v142
    %191 = vmatpush.msra.mxu0 %v141
    %192 = vmatpush.msra.mxu0 %v140
    %193 = vmatpush.msra.mxu0 %v139
    %194 = vmatmul.f32.gmra.mxu0 %v176
    %v195 = vpop.f32.mrf.mxu0
    %v196 = vadd.f32 %v173, %v195
    %197 = vdwg.mxu0
    %v199 = vperm.slane %v147, 0
    %v201 = vadd.f32 %v196, %v199
    %v202 = vxor.u32 %v201, 2147483648
    %v203 = vmul.f32 %v202, 1.442695
    %v204 = vpow.pop %v203
    %v205 = vadd.f32 %v204, 1.0
    %v206 = vrcp.pop %v205
    %v207 = vmul.f32 %v205, %v206
    %v208 = vsub.f32 1.0, %v207
    %v209 = vmul.f32 %v206, %v208
    %v210 = vadd.f32 %v206, %v209
    %vm211 = vweird.f32 %v205
    %vm212 = vweird.f32 %v206
    %vm213 = vmor %vm211, %vm212
    %v214 = vsel %vm213, %v206, %v210
    %v215 = vand.u32 2147483647, %v205
    %vm216 = vcmp.eq.f32.partialorder %v215, 8.507059e+37
    %v217 = vand.u32 %v205, 2147483648
    %v218 = vor.u32 1.1754944e-38, %v217
    %v219 = vsel %vm216, %v218, %v214
    %v220 = vmul.f32 1.0, %v219
    %v221 = vtanh.pop %v201
    %223 = vrot.lane.b32.xlu0 %v149, 32
    %v224 = vpop.permute.xlu0 %223
    %v226 = vmul.f32 %v220, %v224
    %228 = vrot.lane.b32.xlu0 %v221, 64
    %v229 = vpop.permute.xlu0 %228
    %v231 = vmul.f32 %v220, %v229
    %233 = vrot.lane.b32.xlu0 %v231, 32
    %v234 = vpop.permute.xlu0 %233
    %v236 = vadd.f32 %v226, %v234
    %v237 = vtanh.pop %v236
    %239 = vrot.lane.b32.xlu0 %v237, 64
    %v240 = vpop.permute.xlu0 %239
    %v242 = vmul.f32 %v220, %v240
    %244 = vrot.lane.b32.xlu0 %v242, 32
    %v245 = vpop.permute.xlu0 %244
    %247 = vst.msk [vmem:[#allocation2] sm:$0xff] %vm151, %v245
    %s248 = scalar_lea.vmem [#allocation4], 8
    %v249 = vld [vmem:[%s248] sm:$0xff]
    %v250 = vsel %vm151, %v245, 0
    %252 = vmatpush.msra.mxu0 0.0
    %253 = vmatpush.msra.mxu0 0.0
    %254 = vmatpush.msra.mxu0 0.0
    %255 = vmatpush.msra.mxu0 0.0
    %256 = vmatpush.msra.mxu0 0.0
    %257 = vmatpush.msra.mxu0 0.0
    %258 = vmatpush.msra.mxu0 0.0
    %259 = vmatpush.msra.mxu0 0.0
    %260 = vmatpush.msra.mxu0 0.0
    %261 = vmatpush.msra.mxu0 0.0
    %262 = vmatpush.msra.mxu0 0.0
    %263 = vmatpush.msra.mxu0 0.0
    %264 = vmatpush.msra.mxu0 %v146
    %265 = vmatpush.msra.mxu0 %v145
    %266 = vmatpush.msra.mxu0 %v144
    %267 = vmatpush.msra.mxu0 %v143
    %268 = vmatmul.f32.gmra.mxu0 %v250
    %v269 = vpop.f32.mrf.mxu0
    %v270 = vadd.f32 0.0, %v269
    %271 = vdwg.mxu0
    %v273 = vsel %vm151, %v249, 0
    %275 = vmatpush.msra.mxu0 0.0
    %276 = vmatpush.msra.mxu0 0.0
    %277 = vmatpush.msra.mxu0 0.0
    %278 = vmatpush.msra.mxu0 0.0
    %279 = vmatpush.msra.mxu0 0.0
    %280 = vmatpush.msra.mxu0 0.0
    %281 = vmatpush.msra.mxu0 0.0
    %282 = vmatpush.msra.mxu0 0.0
    %283 = vmatpush.msra.mxu0 0.0
    %284 = vmatpush.msra.mxu0 0.0
    %285 = vmatpush.msra.mxu0 0.0
    %286 = vmatpush.msra.mxu0 0.0
    %287 = vmatpush.msra.mxu0 %v142
    %288 = vmatpush.msra.mxu0 %v141
    %289 = vmatpush.msra.mxu0 %v140
    %290 = vmatpush.msra.mxu0 %v139
    %291 = vmatmul.f32.gmra.mxu0 %v273
    %v292 = vpop.f32.mrf.mxu0
    %v293 = vadd.f32 %v270, %v292
    %294 = vdwg.mxu0
    %v295 = vadd.f32 %v293, %v199
    %v296 = vxor.u32 %v295, 2147483648
    %v297 = vmul.f32 %v296, 1.442695
    %v298 = vpow.pop %v297
    %v299 = vadd.f32 %v298, 1.0
    %v300 = vrcp.pop %v299
    %v301 = vmul.f32 %v299, %v300
    %v302 = vsub.f32 1.0, %v301
    %v303 = vmul.f32 %v300, %v302
    %v304 = vadd.f32 %v300, %v303
    %vm305 = vweird.f32 %v299
    %vm306 = vweird.f32 %v300
    %vm307 = vmor %vm305, %vm306
    %v308 = vsel %vm307, %v300, %v304
    %v309 = vand.u32 2147483647, %v299
    %vm310 = vcmp.eq.f32.partialorder %v309, 8.507059e+37
    %v311 = vand.u32 %v299, 2147483648
    %v312 = vor.u32 1.1754944e-38, %v311
    %v313 = vsel %vm310, %v312, %v308
    %v314 = vmul.f32 1.0, %v313
    %v315 = vtanh.pop %v295
    %v316 = vmul.f32 %v314, %v236
    %318 = vrot.lane.b32.xlu0 %v315, 64
    %v319 = vpop.permute.xlu0 %318
    %v321 = vmul.f32 %v314, %v319
    %323 = vrot.lane.b32.xlu0 %v321, 32
    %v324 = vpop.permute.xlu0 %323
    %v326 = vadd.f32 %v316, %v324
    %v327 = vtanh.pop %v326
    %329 = vrot.lane.b32.xlu0 %v327, 64
    %v330 = vpop.permute.xlu0 %329
    %v332 = vmul.f32 %v314, %v330
    %334 = vrot.lane.b32.xlu0 %v332, 32
    %v335 = vpop.permute.xlu0 %334
    %s337 = scalar_lea.vmem [#allocation2], 8
    %338 = vst.msk [vmem:[%s337] sm:$0xff] %vm151, %v335
    %s339 = scalar_lea.vmem [#allocation4], 16
    %v340 = vld [vmem:[%s339] sm:$0xff]
    %v341 = vsel %vm151, %v335, 0
    %343 = vmatpush.msra.mxu0 0.0
    %344 = vmatpush.msra.mxu0 0.0
    %345 = vmatpush.msra.mxu0 0.0
    %346 = vmatpush.msra.mxu0 0.0
    %347 = vmatpush.msra.mxu0 0.0
    %348 = vmatpush.msra.mxu0 0.0
    %349 = vmatpush.msra.mxu0 0.0
    %350 = vmatpush.msra.mxu0 0.0
    %351 = vmatpush.msra.mxu0 0.0
    %352 = vmatpush.msra.mxu0 0.0
    %353 = vmatpush.msra.mxu0 0.0
    %354 = vmatpush.msra.mxu0 0.0
    %355 = vmatpush.msra.mxu0 %v146
    %356 = vmatpush.msra.mxu0 %v145
    %357 = vmatpush.msra.mxu0 %v144
    %358 = vmatpush.msra.mxu0 %v143
    %359 = vmatmul.f32.gmra.mxu0 %v341
    %v360 = vpop.f32.mrf.mxu0
    %v361 = vadd.f32 0.0, %v360
    %362 = vdwg.mxu0
    %v364 = vsel %vm151, %v340, 0
    %366 = vmatpush.msra.mxu0 0.0
    %367 = vmatpush.msra.mxu0 0.0
    %368 = vmatpush.msra.mxu0 0.0
    %369 = vmatpush.msra.mxu0 0.0
    %370 = vmatpush.msra.mxu0 0.0
    %371 = vmatpush.msra.mxu0 0.0
    %372 = vmatpush.msra.mxu0 0.0
    %373 = vmatpush.msra.mxu0 0.0
    %374 = vmatpush.msra.mxu0 0.0
    %375 = vmatpush.msra.mxu0 0.0
    %376 = vmatpush.msra.mxu0 0.0
    %377 = vmatpush.msra.mxu0 0.0
    %378 = vmatpush.msra.mxu0 %v142
    %379 = vmatpush.msra.mxu0 %v141
    %380 = vmatpush.msra.mxu0 %v140
    %381 = vmatpush.msra.mxu0 %v139
    %382 = vmatmul.f32.gmra.mxu0 %v364
    %v383 = vpop.f32.mrf.mxu0
    %v384 = vadd.f32 %v361, %v383
    %385 = vdwg.mxu0
    %v386 = vadd.f32 %v384, %v199
    %v387 = vxor.u32 %v386, 2147483648
    %v388 = vmul.f32 %v387, 1.442695
    %v389 = vpow.pop %v388
    %v390 = vadd.f32 %v389, 1.0
    %v391 = vrcp.pop %v390
    %v392 = vmul.f32 %v390, %v391
    %v393 = vsub.f32 1.0, %v392
    %v394 = vmul.f32 %v391, %v393
    %v395 = vadd.f32 %v391, %v394
    %vm396 = vweird.f32 %v390
    %vm397 = vweird.f32 %v391
    %vm398 = vmor %vm396, %vm397
    %v399 = vsel %vm398, %v391, %v395
    %v400 = vand.u32 2147483647, %v390
    %vm401 = vcmp.eq.f32.partialorder %v400, 8.507059e+37
    %v402 = vand.u32 %v390, 2147483648
    %v403 = vor.u32 1.1754944e-38, %v402
    %v404 = vsel %vm401, %v403, %v399
    %v405 = vmul.f32 1.0, %v404
    %v406 = vtanh.pop %v386
    %v407 = vmul.f32 %v405, %v326
    %409 = vrot.lane.b32.xlu0 %v406, 64
    %v410 = vpop.permute.xlu0 %409
    %v412 = vmul.f32 %v405, %v410
    %414 = vrot.lane.b32.xlu0 %v412, 32
    %v415 = vpop.permute.xlu0 %414
    %v417 = vadd.f32 %v407, %v415
    %v418 = vtanh.pop %v417
    %420 = vrot.lane.b32.xlu0 %v418, 64
    %v421 = vpop.permute.xlu0 %420
    %v423 = vmul.f32 %v405, %v421
    %425 = vrot.lane.b32.xlu0 %v423, 32
    %v426 = vpop.permute.xlu0 %425
    %s428 = scalar_lea.vmem [#allocation2], 16
    %429 = vst.msk [vmem:[%s428] sm:$0xff] %vm151, %v426
    %s430 = scalar_lea.vmem [#allocation4], 24
    %v431 = vld [vmem:[%s430] sm:$0xff]
    %v432 = vsel %vm151, %v426, 0
    %434 = vmatpush.msra.mxu0 0.0
    %435 = vmatpush.msra.mxu0 0.0
    %436 = vmatpush.msra.mxu0 0.0
    %437 = vmatpush.msra.mxu0 0.0
    %438 = vmatpush.msra.mxu0 0.0
    %439 = vmatpush.msra.mxu0 0.0
    %440 = vmatpush.msra.mxu0 0.0
    %441 = vmatpush.msra.mxu0 0.0
    %442 = vmatpush.msra.mxu0 0.0
    %443 = vmatpush.msra.mxu0 0.0
    %444 = vmatpush.msra.mxu0 0.0
    %445 = vmatpush.msra.mxu0 0.0
    %446 = vmatpush.msra.mxu0 %v146
    %447 = vmatpush.msra.mxu0 %v145
    %448 = vmatpush.msra.mxu0 %v144
    %449 = vmatpush.msra.mxu0 %v143
    %450 = vmatmul.f32.gmra.mxu0 %v432
    %v451 = vpop.f32.mrf.mxu0
    %v452 = vadd.f32 0.0, %v451
    %453 = vdwg.mxu0
    %v455 = vsel %vm151, %v431, 0
    %457 = vmatpush.msra.mxu0 0.0
    %458 = vmatpush.msra.mxu0 0.0
    %459 = vmatpush.msra.mxu0 0.0
    %460 = vmatpush.msra.mxu0 0.0
    %461 = vmatpush.msra.mxu0 0.0
    %462 = vmatpush.msra.mxu0 0.0
    %463 = vmatpush.msra.mxu0 0.0
    %464 = vmatpush.msra.mxu0 0.0
    %465 = vmatpush.msra.mxu0 0.0
    %466 = vmatpush.msra.mxu0 0.0
    %467 = vmatpush.msra.mxu0 0.0
    %468 = vmatpush.msra.mxu0 0.0
    %469 = vmatpush.msra.mxu0 %v142
    %470 = vmatpush.msra.mxu0 %v141
    %471 = vmatpush.msra.mxu0 %v140
    %472 = vmatpush.msra.mxu0 %v139
    %473 = vmatmul.f32.gmra.mxu0 %v455
    %v474 = vpop.f32.mrf.mxu0
    %v475 = vadd.f32 %v452, %v474
    %476 = vdwg.mxu0
    %v477 = vadd.f32 %v475, %v199
    %v478 = vxor.u32 %v477, 2147483648
    %v479 = vmul.f32 %v478, 1.442695
    %v480 = vpow.pop %v479
    %v481 = vadd.f32 %v480, 1.0
    %v482 = vrcp.pop %v481
    %v483 = vmul.f32 %v481, %v482
    %v484 = vsub.f32 1.0, %v483
    %v485 = vmul.f32 %v482, %v484
    %v486 = vadd.f32 %v482, %v485
    %vm487 = vweird.f32 %v481
    %vm488 = vweird.f32 %v482
    %vm489 = vmor %vm487, %vm488
    %v490 = vsel %vm489, %v482, %v486
    %v491 = vand.u32 2147483647, %v481
    %vm492 = vcmp.eq.f32.partialorder %v491, 8.507059e+37
    %v493 = vand.u32 %v481, 2147483648
    %v494 = vor.u32 1.1754944e-38, %v493
    %v495 = vsel %vm492, %v494, %v490
    %v496 = vmul.f32 1.0, %v495
    %v497 = vtanh.pop %v477
    %v498 = vmul.f32 %v496, %v417
    %500 = vrot.lane.b32.xlu0 %v497, 64
    %v501 = vpop.permute.xlu0 %500
    %v503 = vmul.f32 %v496, %v501
    %505 = vrot.lane.b32.xlu0 %v503, 32
    %v506 = vpop.permute.xlu0 %505
    %v508 = vadd.f32 %v498, %v506
    %v509 = vtanh.pop %v508
    %511 = vrot.lane.b32.xlu0 %v509, 64
    %v512 = vpop.permute.xlu0 %511
    %v514 = vmul.f32 %v496, %v512
    %516 = vrot.lane.b32.xlu0 %v514, 32
    %v517 = vpop.permute.xlu0 %516
    %s519 = scalar_lea.vmem [#allocation2], 24
    %520 = vst.msk [vmem:[%s519] sm:$0xff] %vm151, %v517
    %s521 = scalar_lea.vmem [#allocation4], 32
    %v522 = vld [vmem:[%s521] sm:$0xff]
    %v523 = vsel %vm151, %v517, 0
    %525 = vmatpush.msra.mxu0 0.0
    %526 = vmatpush.msra.mxu0 0.0
    %527 = vmatpush.msra.mxu0 0.0
    %528 = vmatpush.msra.mxu0 0.0
    %529 = vmatpush.msra.mxu0 0.0
    %530 = vmatpush.msra.mxu0 0.0
    %531 = vmatpush.msra.mxu0 0.0
    %532 = vmatpush.msra.mxu0 0.0
    %533 = vmatpush.msra.mxu0 0.0
    %534 = vmatpush.msra.mxu0 0.0
    %535 = vmatpush.msra.mxu0 0.0
    %536 = vmatpush.msra.mxu0 0.0
    %537 = vmatpush.msra.mxu0 %v146
    %538 = vmatpush.msra.mxu0 %v145
    %539 = vmatpush.msra.mxu0 %v144
    %540 = vmatpush.msra.mxu0 %v143
    %541 = vmatmul.f32.gmra.mxu0 %v523
    %v542 = vpop.f32.mrf.mxu0
    %v543 = vadd.f32 0.0, %v542
    %544 = vdwg.mxu0
    %v546 = vsel %vm151, %v522, 0
    %548 = vmatpush.msra.mxu0 0.0
    %549 = vmatpush.msra.mxu0 0.0
    %550 = vmatpush.msra.mxu0 0.0
    %551 = vmatpush.msra.mxu0 0.0
    %552 = vmatpush.msra.mxu0 0.0
    %553 = vmatpush.msra.mxu0 0.0
    %554 = vmatpush.msra.mxu0 0.0
    %555 = vmatpush.msra.mxu0 0.0
    %556 = vmatpush.msra.mxu0 0.0
    %557 = vmatpush.msra.mxu0 0.0
    %558 = vmatpush.msra.mxu0 0.0
    %559 = vmatpush.msra.mxu0 0.0
    %560 = vmatpush.msra.mxu0 %v142
    %561 = vmatpush.msra.mxu0 %v141
    %562 = vmatpush.msra.mxu0 %v140
    %563 = vmatpush.msra.mxu0 %v139
    %564 = vmatmul.f32.gmra.mxu0 %v546
    %v565 = vpop.f32.mrf.mxu0
    %v566 = vadd.f32 %v543, %v565
    %567 = vdwg.mxu0
    %v568 = vadd.f32 %v566, %v199
    %v569 = vxor.u32 %v568, 2147483648
    %v570 = vmul.f32 %v569, 1.442695
    %v571 = vpow.pop %v570
    %v572 = vadd.f32 %v571, 1.0
    %v573 = vrcp.pop %v572
    %v574 = vmul.f32 %v572, %v573
    %v575 = vsub.f32 1.0, %v574
    %v576 = vmul.f32 %v573, %v575
    %v577 = vadd.f32 %v573, %v576
    %vm578 = vweird.f32 %v572
    %vm579 = vweird.f32 %v573
    %vm580 = vmor %vm578, %vm579
    %v581 = vsel %vm580, %v573, %v577
    %v582 = vand.u32 2147483647, %v572
    %vm583 = vcmp.eq.f32.partialorder %v582, 8.507059e+37
    %v584 = vand.u32 %v572, 2147483648
    %v585 = vor.u32 1.1754944e-38, %v584
    %v586 = vsel %vm583, %v585, %v581
    %v587 = vmul.f32 1.0, %v586
    %v588 = vtanh.pop %v568
    %v589 = vmul.f32 %v587, %v508
    %591 = vrot.lane.b32.xlu0 %v588, 64
    %v592 = vpop.permute.xlu0 %591
    %v594 = vmul.f32 %v587, %v592
    %596 = vrot.lane.b32.xlu0 %v594, 32
    %v597 = vpop.permute.xlu0 %596
    %v599 = vadd.f32 %v589, %v597
    %v600 = vtanh.pop %v599
    %602 = vrot.lane.b32.xlu0 %v600, 64
    %v603 = vpop.permute.xlu0 %602
    %v605 = vmul.f32 %v587, %v603
    %607 = vrot.lane.b32.xlu0 %v605, 32
    %v608 = vpop.permute.xlu0 %607
    %s610 = scalar_lea.vmem [#allocation2], 32
    %611 = vst.msk [vmem:[%s610] sm:$0xff] %vm151, %v608
    %s612 = scalar_lea.vmem [#allocation4], 40
    %v613 = vld [vmem:[%s612] sm:$0xff]
    %v614 = vsel %vm151, %v608, 0
    %616 = vmatpush.msra.mxu0 0.0
    %617 = vmatpush.msra.mxu0 0.0
    %618 = vmatpush.msra.mxu0 0.0
    %619 = vmatpush.msra.mxu0 0.0
    %620 = vmatpush.msra.mxu0 0.0
    %621 = vmatpush.msra.mxu0 0.0
    %622 = vmatpush.msra.mxu0 0.0
    %623 = vmatpush.msra.mxu0 0.0
    %624 = vmatpush.msra.mxu0 0.0
    %625 = vmatpush.msra.mxu0 0.0
    %626 = vmatpush.msra.mxu0 0.0
    %627 = vmatpush.msra.mxu0 0.0
    %628 = vmatpush.msra.mxu0 %v146
    %629 = vmatpush.msra.mxu0 %v145
    %630 = vmatpush.msra.mxu0 %v144
    %631 = vmatpush.msra.mxu0 %v143
    %632 = vmatmul.f32.gmra.mxu0 %v614
    %v633 = vpop.f32.mrf.mxu0
    %v634 = vadd.f32 0.0, %v633
    %635 = vdwg.mxu0
    %v637 = vsel %vm151, %v613, 0
    %639 = vmatpush.msra.mxu0 0.0
    %640 = vmatpush.msra.mxu0 0.0
    %641 = vmatpush.msra.mxu0 0.0
    %642 = vmatpush.msra.mxu0 0.0
    %643 = vmatpush.msra.mxu0 0.0
    %644 = vmatpush.msra.mxu0 0.0
    %645 = vmatpush.msra.mxu0 0.0
    %646 = vmatpush.msra.mxu0 0.0
    %647 = vmatpush.msra.mxu0 0.0
    %648 = vmatpush.msra.mxu0 0.0
    %649 = vmatpush.msra.mxu0 0.0
    %650 = vmatpush.msra.mxu0 0.0
    %651 = vmatpush.msra.mxu0 %v142
    %652 = vmatpush.msra.mxu0 %v141
    %653 = vmatpush.msra.mxu0 %v140
    %654 = vmatpush.msra.mxu0 %v139
    %655 = vmatmul.f32.gmra.mxu0 %v637
    %v656 = vpop.f32.mrf.mxu0
    %v657 = vadd.f32 %v634, %v656
    %658 = vdwg.mxu0
    %v659 = vadd.f32 %v657, %v199
    %v660 = vxor.u32 %v659, 2147483648
    %v661 = vmul.f32 %v660, 1.442695
    %v662 = vpow.pop %v661
    %v663 = vadd.f32 %v662, 1.0
    %v664 = vrcp.pop %v663
    %v665 = vmul.f32 %v663, %v664
    %v666 = vsub.f32 1.0, %v665
    %v667 = vmul.f32 %v664, %v666
    %v668 = vadd.f32 %v664, %v667
    %vm669 = vweird.f32 %v663
    %vm670 = vweird.f32 %v664
    %vm671 = vmor %vm669, %vm670
    %v672 = vsel %vm671, %v664, %v668
    %v673 = vand.u32 2147483647, %v663
    %vm674 = vcmp.eq.f32.partialorder %v673, 8.507059e+37
    %v675 = vand.u32 %v663, 2147483648
    %v676 = vor.u32 1.1754944e-38, %v675
    %v677 = vsel %vm674, %v676, %v672
    %v678 = vmul.f32 1.0, %v677
    %v679 = vtanh.pop %v659
    %v680 = vmul.f32 %v678, %v599
    %682 = vrot.lane.b32.xlu0 %v679, 64
    %v683 = vpop.permute.xlu0 %682
    %v685 = vmul.f32 %v678, %v683
    %687 = vrot.lane.b32.xlu0 %v685, 32
    %v688 = vpop.permute.xlu0 %687
    %v690 = vadd.f32 %v680, %v688
    %v691 = vtanh.pop %v690
    %693 = vrot.lane.b32.xlu0 %v691, 64
    %v694 = vpop.permute.xlu0 %693
    %v696 = vmul.f32 %v678, %v694
    %698 = vrot.lane.b32.xlu0 %v696, 32
    %v699 = vpop.permute.xlu0 %698
    %s701 = scalar_lea.vmem [#allocation2], 40
    %702 = vst.msk [vmem:[%s701] sm:$0xff] %vm151, %v699
    %s703 = scalar_lea.vmem [#allocation4], 48
    %v704 = vld [vmem:[%s703] sm:$0xff]
    %v705 = vsel %vm151, %v699, 0
    %707 = vmatpush.msra.mxu0 0.0
    %708 = vmatpush.msra.mxu0 0.0
    %709 = vmatpush.msra.mxu0 0.0
    %710 = vmatpush.msra.mxu0 0.0
    %711 = vmatpush.msra.mxu0 0.0
    %712 = vmatpush.msra.mxu0 0.0
    %713 = vmatpush.msra.mxu0 0.0
    %714 = vmatpush.msra.mxu0 0.0
    %715 = vmatpush.msra.mxu0 0.0
    %716 = vmatpush.msra.mxu0 0.0
    %717 = vmatpush.msra.mxu0 0.0
    %718 = vmatpush.msra.mxu0 0.0
    %719 = vmatpush.msra.mxu0 %v146
    %720 = vmatpush.msra.mxu0 %v145
    %721 = vmatpush.msra.mxu0 %v144
    %722 = vmatpush.msra.mxu0 %v143
    %723 = vmatmul.f32.gmra.mxu0 %v705
    %v724 = vpop.f32.mrf.mxu0
    %v725 = vadd.f32 0.0, %v724
    %726 = vdwg.mxu0
    %v728 = vsel %vm151, %v704, 0
    %730 = vmatpush.msra.mxu0 0.0
    %731 = vmatpush.msra.mxu0 0.0
    %732 = vmatpush.msra.mxu0 0.0
    %733 = vmatpush.msra.mxu0 0.0
    %734 = vmatpush.msra.mxu0 0.0
    %735 = vmatpush.msra.mxu0 0.0
    %736 = vmatpush.msra.mxu0 0.0
    %737 = vmatpush.msra.mxu0 0.0
    %738 = vmatpush.msra.mxu0 0.0
    %739 = vmatpush.msra.mxu0 0.0
    %740 = vmatpush.msra.mxu0 0.0
    %741 = vmatpush.msra.mxu0 0.0
    %742 = vmatpush.msra.mxu0 %v142
    %743 = vmatpush.msra.mxu0 %v141
    %744 = vmatpush.msra.mxu0 %v140
    %745 = vmatpush.msra.mxu0 %v139
    %746 = vmatmul.f32.gmra.mxu0 %v728
    %v747 = vpop.f32.mrf.mxu0
    %v748 = vadd.f32 %v725, %v747
    %749 = vdwg.mxu0
    %v750 = vadd.f32 %v748, %v199
    %v751 = vxor.u32 %v750, 2147483648
    %v752 = vmul.f32 %v751, 1.442695
    %v753 = vpow.pop %v752
    %v754 = vadd.f32 %v753, 1.0
    %v755 = vrcp.pop %v754
    %v756 = vmul.f32 %v754, %v755
    %v757 = vsub.f32 1.0, %v756
    %v758 = vmul.f32 %v755, %v757
    %v759 = vadd.f32 %v755, %v758
    %vm760 = vweird.f32 %v754
    %vm761 = vweird.f32 %v755
    %vm762 = vmor %vm760, %vm761
    %v763 = vsel %vm762, %v755, %v759
    %v764 = vand.u32 2147483647, %v754
    %vm765 = vcmp.eq.f32.partialorder %v764, 8.507059e+37
    %v766 = vand.u32 %v754, 2147483648
    %v767 = vor.u32 1.1754944e-38, %v766
    %v768 = vsel %vm765, %v767, %v763
    %v769 = vmul.f32 1.0, %v768
    %v770 = vtanh.pop %v750
    %v771 = vmul.f32 %v769, %v690
    %773 = vrot.lane.b32.xlu0 %v770, 64
    %v774 = vpop.permute.xlu0 %773
    %v776 = vmul.f32 %v769, %v774
    %778 = vrot.lane.b32.xlu0 %v776, 32
    %v779 = vpop.permute.xlu0 %778
    %v781 = vadd.f32 %v771, %v779
    %v782 = vtanh.pop %v781
    %784 = vrot.lane.b32.xlu0 %v782, 64
    %v785 = vpop.permute.xlu0 %784
    %v787 = vmul.f32 %v769, %v785
    %789 = vrot.lane.b32.xlu0 %v787, 32
    %v790 = vpop.permute.xlu0 %789
    %s792 = scalar_lea.vmem [#allocation2], 48
    %793 = vst.msk [vmem:[%s792] sm:$0xff] %vm151, %v790
    %s794 = scalar_lea.vmem [#allocation4], 56
    %v795 = vld [vmem:[%s794] sm:$0xff]
    %v796 = vsel %vm151, %v790, 0
    %798 = vmatpush.msra.mxu0 0.0
    %799 = vmatpush.msra.mxu0 0.0
    %800 = vmatpush.msra.mxu0 0.0
    %801 = vmatpush.msra.mxu0 0.0
    %802 = vmatpush.msra.mxu0 0.0
    %803 = vmatpush.msra.mxu0 0.0
    %804 = vmatpush.msra.mxu0 0.0
    %805 = vmatpush.msra.mxu0 0.0
    %806 = vmatpush.msra.mxu0 0.0
    %807 = vmatpush.msra.mxu0 0.0
    %808 = vmatpush.msra.mxu0 0.0
    %809 = vmatpush.msra.mxu0 0.0
    %810 = vmatpush.msra.mxu0 %v146
    %811 = vmatpush.msra.mxu0 %v145
    %812 = vmatpush.msra.mxu0 %v144
    %813 = vmatpush.msra.mxu0 %v143
    %814 = vmatmul.f32.gmra.mxu0 %v796
    %v815 = vpop.f32.mrf.mxu0
    %v816 = vadd.f32 0.0, %v815
    %817 = vdwg.mxu0
    %v819 = vsel %vm151, %v795, 0
    %821 = vmatpush.msra.mxu0 0.0
    %822 = vmatpush.msra.mxu0 0.0
    %823 = vmatpush.msra.mxu0 0.0
    %824 = vmatpush.msra.mxu0 0.0
    %825 = vmatpush.msra.mxu0 0.0
    %826 = vmatpush.msra.mxu0 0.0
    %827 = vmatpush.msra.mxu0 0.0
    %828 = vmatpush.msra.mxu0 0.0
    %829 = vmatpush.msra.mxu0 0.0
    %830 = vmatpush.msra.mxu0 0.0
    %831 = vmatpush.msra.mxu0 0.0
    %832 = vmatpush.msra.mxu0 0.0
    %833 = vmatpush.msra.mxu0 %v142
    %834 = vmatpush.msra.mxu0 %v141
    %835 = vmatpush.msra.mxu0 %v140
    %836 = vmatpush.msra.mxu0 %v139
    %837 = vmatmul.f32.gmra.mxu0 %v819
    %v838 = vpop.f32.mrf.mxu0
    %v839 = vadd.f32 %v816, %v838
    %840 = vdwg.mxu0
    %v841 = vadd.f32 %v839, %v199
    %v842 = vxor.u32 %v841, 2147483648
    %v843 = vmul.f32 %v842, 1.442695
    %v844 = vpow.pop %v843
    %v845 = vadd.f32 %v844, 1.0
    %v846 = vrcp.pop %v845
    %v847 = vmul.f32 %v845, %v846
    %v848 = vsub.f32 1.0, %v847
    %v849 = vmul.f32 %v846, %v848
    %v850 = vadd.f32 %v846, %v849
    %vm851 = vweird.f32 %v845
    %vm852 = vweird.f32 %v846
    %vm853 = vmor %vm851, %vm852
    %v854 = vsel %vm853, %v846, %v850
    %v855 = vand.u32 2147483647, %v845
    %vm856 = vcmp.eq.f32.partialorder %v855, 8.507059e+37
    %v857 = vand.u32 %v845, 2147483648
    %v858 = vor.u32 1.1754944e-38, %v857
    %v859 = vsel %vm856, %v858, %v854
    %v860 = vmul.f32 1.0, %v859
    %v861 = vtanh.pop %v841
    %v862 = vmul.f32 %v860, %v781
    %864 = vrot.lane.b32.xlu0 %v861, 64
    %v865 = vpop.permute.xlu0 %864
    %v867 = vmul.f32 %v860, %v865
    %869 = vrot.lane.b32.xlu0 %v867, 32
    %v870 = vpop.permute.xlu0 %869
    %v872 = vadd.f32 %v862, %v870
    %v873 = vtanh.pop %v872
    %875 = vrot.lane.b32.xlu0 %v873, 64
    %v876 = vpop.permute.xlu0 %875
    %v878 = vmul.f32 %v860, %v876
    %880 = vrot.lane.b32.xlu0 %v878, 32
    %v881 = vpop.permute.xlu0 %880
    %s883 = scalar_lea.vmem [#allocation2], 56
    %884 = vst.msk [vmem:[%s883] sm:$0xff] %vm151, %v881
    %885 = vst.msk [vmem:[#allocation15] sm:$0xff] %vm151, %v881
    %887 = vrot.lane.b32.xlu0 %v872, 96
    %v888 = vpop.permute.xlu0 %887
    %890 = vst.msk [vmem:[#allocation16] sm:$0xff] %vm151, %v888
    %v891 = vld [vmem:[#allocation12] sm:$0xff]
    %v892 = vld [vmem:[#allocation12 + $0x8] sm:$0xff]
    %v893 = vld [vmem:[#allocation12 + $0x10] sm:$0xff]
    %v894 = vld [vmem:[#allocation12 + $0x18] sm:$0xff]
    %v895 = vld [vmem:[#allocation13] sm:$0xff]
    %v896 = vld [vmem:[#allocation13 + $0x8] sm:$0xff]
    %v897 = vld [vmem:[#allocation13 + $0x10] sm:$0xff]
    %v898 = vld [vmem:[#allocation13 + $0x18] sm:$0xff]
    %v899 = vld [vmem:[%s8] sm:$0x1]
    %s900 = scalar_lea.vmem [#allocation7], 8
    %v901 = vld [vmem:[%s900] sm:$0xff]
    %s902 = scalar_lea.vmem [#allocation9], 8
    %v903 = vld [vmem:[%s902] sm:$0xff]
    %v904 = vld [vmem:[#allocation2] sm:$0xff]
    %v906 = vsel %vm151, %v901, 0
    %908 = vmatpush.msra.mxu0 0.0
    %909 = vmatpush.msra.mxu0 0.0
    %910 = vmatpush.msra.mxu0 0.0
    %911 = vmatpush.msra.mxu0 0.0
    %912 = vmatpush.msra.mxu0 0.0
    %913 = vmatpush.msra.mxu0 0.0
    %914 = vmatpush.msra.mxu0 0.0
    %915 = vmatpush.msra.mxu0 0.0
    %916 = vmatpush.msra.mxu0 0.0
    %917 = vmatpush.msra.mxu0 0.0
    %918 = vmatpush.msra.mxu0 0.0
    %919 = vmatpush.msra.mxu0 0.0
    %920 = vmatpush.msra.mxu0 %v898
    %921 = vmatpush.msra.mxu0 %v897
    %922 = vmatpush.msra.mxu0 %v896
    %923 = vmatpush.msra.mxu0 %v895
    %924 = vmatmul.f32.gmra.mxu0 %v906
    %v925 = vpop.f32.mrf.mxu0
    %v926 = vadd.f32 0.0, %v925
    %927 = vdwg.mxu0
    %v929 = vsel %vm151, %v904, 0
    %931 = vmatpush.msra.mxu0 0.0
    %932 = vmatpush.msra.mxu0 0.0
    %933 = vmatpush.msra.mxu0 0.0
    %934 = vmatpush.msra.mxu0 0.0
    %935 = vmatpush.msra.mxu0 0.0
    %936 = vmatpush.msra.mxu0 0.0
    %937 = vmatpush.msra.mxu0 0.0
    %938 = vmatpush.msra.mxu0 0.0
    %939 = vmatpush.msra.mxu0 0.0
    %940 = vmatpush.msra.mxu0 0.0
    %941 = vmatpush.msra.mxu0 0.0
    %942 = vmatpush.msra.mxu0 0.0
    %943 = vmatpush.msra.mxu0 %v894
    %944 = vmatpush.msra.mxu0 %v893
    %945 = vmatpush.msra.mxu0 %v892
    %946 = vmatpush.msra.mxu0 %v891
    %947 = vmatmul.f32.gmra.mxu0 %v929
    %v948 = vpop.f32.mrf.mxu0
    %v949 = vadd.f32 %v926, %v948
    %950 = vdwg.mxu0
    %v952 = vperm.slane %v899, 0
    %v954 = vadd.f32 %v949, %v952
    %v955 = vxor.u32 %v954, 2147483648
    %v956 = vmul.f32 %v955, 1.442695
    %v957 = vpow.pop %v956
    %v958 = vadd.f32 %v957, 1.0
    %v959 = vrcp.pop %v958
    %v960 = vmul.f32 %v958, %v959
    %v961 = vsub.f32 1.0, %v960
    %v962 = vmul.f32 %v959, %v961
    %v963 = vadd.f32 %v959, %v962
    %vm964 = vweird.f32 %v958
    %vm965 = vweird.f32 %v959
    %vm966 = vmor %vm964, %vm965
    %v967 = vsel %vm966, %v959, %v963
    %v968 = vand.u32 2147483647, %v958
    %vm969 = vcmp.eq.f32.partialorder %v968, 8.507059e+37
    %v970 = vand.u32 %v958, 2147483648
    %v971 = vor.u32 1.1754944e-38, %v970
    %v972 = vsel %vm969, %v971, %v967
    %v973 = vmul.f32 1.0, %v972
    %v974 = vtanh.pop %v954
    %976 = vrot.lane.b32.xlu0 %v903, 32
    %v977 = vpop.permute.xlu0 %976
    %v979 = vmul.f32 %v973, %v977
    %981 = vrot.lane.b32.xlu0 %v974, 64
    %v982 = vpop.permute.xlu0 %981
    %v984 = vmul.f32 %v973, %v982
    %986 = vrot.lane.b32.xlu0 %v984, 32
    %v987 = vpop.permute.xlu0 %986
    %v989 = vadd.f32 %v979, %v987
    %v990 = vtanh.pop %v989
    %992 = vrot.lane.b32.xlu0 %v990, 64
    %v993 = vpop.permute.xlu0 %992
    %v995 = vmul.f32 %v973, %v993
    %v996 = vld [vmem:[%s337] sm:$0xff]
    %998 = vrot.lane.b32.xlu0 %v995, 32
    %v999 = vpop.permute.xlu0 %998
    %v1000 = vsel %vm151, %v999, 0
    %1002 = vmatpush.msra.mxu0 0.0
    %1003 = vmatpush.msra.mxu0 0.0
    %1004 = vmatpush.msra.mxu0 0.0
    %1005 = vmatpush.msra.mxu0 0.0
    %1006 = vmatpush.msra.mxu0 0.0
    %1007 = vmatpush.msra.mxu0 0.0
    %1008 = vmatpush.msra.mxu0 0.0
    %1009 = vmatpush.msra.mxu0 0.0
    %1010 = vmatpush.msra.mxu0 0.0
    %1011 = vmatpush.msra.mxu0 0.0
    %1012 = vmatpush.msra.mxu0 0.0
    %1013 = vmatpush.msra.mxu0 0.0
    %1014 = vmatpush.msra.mxu0 %v898
    %1015 = vmatpush.msra.mxu0 %v897
    %1016 = vmatpush.msra.mxu0 %v896
    %1017 = vmatpush.msra.mxu0 %v895
    %1018 = vmatmul.f32.gmra.mxu0 %v1000
    %v1019 = vpop.f32.mrf.mxu0
    %v1020 = vadd.f32 0.0, %v1019
    %1021 = vdwg.mxu0
    %v1023 = vsel %vm151, %v996, 0
    %1025 = vmatpush.msra.mxu0 0.0
    %1026 = vmatpush.msra.mxu0 0.0
    %1027 = vmatpush.msra.mxu0 0.0
    %1028 = vmatpush.msra.mxu0 0.0
    %1029 = vmatpush.msra.mxu0 0.0
    %1030 = vmatpush.msra.mxu0 0.0
    %1031 = vmatpush.msra.mxu0 0.0
    %1032 = vmatpush.msra.mxu0 0.0
    %1033 = vmatpush.msra.mxu0 0.0
    %1034 = vmatpush.msra.mxu0 0.0
    %1035 = vmatpush.msra.mxu0 0.0
    %1036 = vmatpush.msra.mxu0 0.0
    %1037 = vmatpush.msra.mxu0 %v894
    %1038 = vmatpush.msra.mxu0 %v893
    %1039 = vmatpush.msra.mxu0 %v892
    %1040 = vmatpush.msra.mxu0 %v891
    %1041 = vmatmul.f32.gmra.mxu0 %v1023
    %v1042 = vpop.f32.mrf.mxu0
    %v1043 = vadd.f32 %v1020, %v1042
    %1044 = vdwg.mxu0
    %v1045 = vadd.f32 %v1043, %v952
    %v1046 = vxor.u32 %v1045, 2147483648
    %v1047 = vmul.f32 %v1046, 1.442695
    %v1048 = vpow.pop %v1047
    %v1049 = vadd.f32 %v1048, 1.0
    %v1050 = vrcp.pop %v1049
    %v1051 = vmul.f32 %v1049, %v1050
    %v1052 = vsub.f32 1.0, %v1051
    %v1053 = vmul.f32 %v1050, %v1052
    %v1054 = vadd.f32 %v1050, %v1053
    %vm1055 = vweird.f32 %v1049
    %vm1056 = vweird.f32 %v1050
    %vm1057 = vmor %vm1055, %vm1056
    %v1058 = vsel %vm1057, %v1050, %v1054
    %v1059 = vand.u32 2147483647, %v1049
    %vm1060 = vcmp.eq.f32.partialorder %v1059, 8.507059e+37
    %v1061 = vand.u32 %v1049, 2147483648
    %v1062 = vor.u32 1.1754944e-38, %v1061
    %v1063 = vsel %vm1060, %v1062, %v1058
    %v1064 = vmul.f32 1.0, %v1063
    %v1065 = vtanh.pop %v1045
    %v1066 = vmul.f32 %v1064, %v989
    %1068 = vrot.lane.b32.xlu0 %v1065, 64
    %v1069 = vpop.permute.xlu0 %1068
    %v1071 = vmul.f32 %v1064, %v1069
    %1073 = vrot.lane.b32.xlu0 %v1071, 32
    %v1074 = vpop.permute.xlu0 %1073
    %v1076 = vadd.f32 %v1066, %v1074
    %v1077 = vtanh.pop %v1076
    %1079 = vrot.lane.b32.xlu0 %v1077, 64
    %v1080 = vpop.permute.xlu0 %1079
    %v1082 = vmul.f32 %v1064, %v1080
    %v1083 = vld [vmem:[%s428] sm:$0xff]
    %1085 = vrot.lane.b32.xlu0 %v1082, 32
    %v1086 = vpop.permute.xlu0 %1085
    %v1087 = vsel %vm151, %v1086, 0
    %1089 = vmatpush.msra.mxu0 0.0
    %1090 = vmatpush.msra.mxu0 0.0
    %1091 = vmatpush.msra.mxu0 0.0
    %1092 = vmatpush.msra.mxu0 0.0
    %1093 = vmatpush.msra.mxu0 0.0
    %1094 = vmatpush.msra.mxu0 0.0
    %1095 = vmatpush.msra.mxu0 0.0
    %1096 = vmatpush.msra.mxu0 0.0
    %1097 = vmatpush.msra.mxu0 0.0
    %1098 = vmatpush.msra.mxu0 0.0
    %1099 = vmatpush.msra.mxu0 0.0
    %1100 = vmatpush.msra.mxu0 0.0
    %1101 = vmatpush.msra.mxu0 %v898
    %1102 = vmatpush.msra.mxu0 %v897
    %1103 = vmatpush.msra.mxu0 %v896
    %1104 = vmatpush.msra.mxu0 %v895
    %1105 = vmatmul.f32.gmra.mxu0 %v1087
    %v1106 = vpop.f32.mrf.mxu0
    %v1107 = vadd.f32 0.0, %v1106
    %1108 = vdwg.mxu0
    %v1110 = vsel %vm151, %v1083, 0
    %1112 = vmatpush.msra.mxu0 0.0
    %1113 = vmatpush.msra.mxu0 0.0
    %1114 = vmatpush.msra.mxu0 0.0
    %1115 = vmatpush.msra.mxu0 0.0
    %1116 = vmatpush.msra.mxu0 0.0
    %1117 = vmatpush.msra.mxu0 0.0
    %1118 = vmatpush.msra.mxu0 0.0
    %1119 = vmatpush.msra.mxu0 0.0
    %1120 = vmatpush.msra.mxu0 0.0
    %1121 = vmatpush.msra.mxu0 0.0
    %1122 = vmatpush.msra.mxu0 0.0
    %1123 = vmatpush.msra.mxu0 0.0
    %1124 = vmatpush.msra.mxu0 %v894
    %1125 = vmatpush.msra.mxu0 %v893
    %1126 = vmatpush.msra.mxu0 %v892
    %1127 = vmatpush.msra.mxu0 %v891
    %1128 = vmatmul.f32.gmra.mxu0 %v1110
    %v1129 = vpop.f32.mrf.mxu0
    %v1130 = vadd.f32 %v1107, %v1129
    %1131 = vdwg.mxu0
    %v1132 = vadd.f32 %v1130, %v952
    %v1133 = vxor.u32 %v1132, 2147483648
    %v1134 = vmul.f32 %v1133, 1.442695
    %v1135 = vpow.pop %v1134
    %v1136 = vadd.f32 %v1135, 1.0
    %v1137 = vrcp.pop %v1136
    %v1138 = vmul.f32 %v1136, %v1137
    %v1139 = vsub.f32 1.0, %v1138
    %v1140 = vmul.f32 %v1137, %v1139
    %v1141 = vadd.f32 %v1137, %v1140
    %vm1142 = vweird.f32 %v1136
    %vm1143 = vweird.f32 %v1137
    %vm1144 = vmor %vm1142, %vm1143
    %v1145 = vsel %vm1144, %v1137, %v1141
    %v1146 = vand.u32 2147483647, %v1136
    %vm1147 = vcmp.eq.f32.partialorder %v1146, 8.507059e+37
    %v1148 = vand.u32 %v1136, 2147483648
    %v1149 = vor.u32 1.1754944e-38, %v1148
    %v1150 = vsel %vm1147, %v1149, %v1145
    %v1151 = vmul.f32 1.0, %v1150
    %v1152 = vtanh.pop %v1132
    %v1153 = vmul.f32 %v1151, %v1076
    %1155 = vrot.lane.b32.xlu0 %v1152, 64
    %v1156 = vpop.permute.xlu0 %1155
    %v1158 = vmul.f32 %v1151, %v1156
    %1160 = vrot.lane.b32.xlu0 %v1158, 32
    %v1161 = vpop.permute.xlu0 %1160
    %v1163 = vadd.f32 %v1153, %v1161
    %v1164 = vtanh.pop %v1163
    %1166 = vrot.lane.b32.xlu0 %v1164, 64
    %v1167 = vpop.permute.xlu0 %1166
    %v1169 = vmul.f32 %v1151, %v1167
    %v1170 = vld [vmem:[%s519] sm:$0xff]
    %1172 = vrot.lane.b32.xlu0 %v1169, 32
    %v1173 = vpop.permute.xlu0 %1172
    %v1174 = vsel %vm151, %v1173, 0
    %1176 = vmatpush.msra.mxu0 0.0
    %1177 = vmatpush.msra.mxu0 0.0
    %1178 = vmatpush.msra.mxu0 0.0
    %1179 = vmatpush.msra.mxu0 0.0
    %1180 = vmatpush.msra.mxu0 0.0
    %1181 = vmatpush.msra.mxu0 0.0
    %1182 = vmatpush.msra.mxu0 0.0
    %1183 = vmatpush.msra.mxu0 0.0
    %1184 = vmatpush.msra.mxu0 0.0
    %1185 = vmatpush.msra.mxu0 0.0
    %1186 = vmatpush.msra.mxu0 0.0
    %1187 = vmatpush.msra.mxu0 0.0
    %1188 = vmatpush.msra.mxu0 %v898
    %1189 = vmatpush.msra.mxu0 %v897
    %1190 = vmatpush.msra.mxu0 %v896
    %1191 = vmatpush.msra.mxu0 %v895
    %1192 = vmatmul.f32.gmra.mxu0 %v1174
    %v1193 = vpop.f32.mrf.mxu0
    %v1194 = vadd.f32 0.0, %v1193
    %1195 = vdwg.mxu0
    %v1197 = vsel %vm151, %v1170, 0
    %1199 = vmatpush.msra.mxu0 0.0
    %1200 = vmatpush.msra.mxu0 0.0
    %1201 = vmatpush.msra.mxu0 0.0
    %1202 = vmatpush.msra.mxu0 0.0
    %1203 = vmatpush.msra.mxu0 0.0
    %1204 = vmatpush.msra.mxu0 0.0
    %1205 = vmatpush.msra.mxu0 0.0
    %1206 = vmatpush.msra.mxu0 0.0
    %1207 = vmatpush.msra.mxu0 0.0
    %1208 = vmatpush.msra.mxu0 0.0
    %1209 = vmatpush.msra.mxu0 0.0
    %1210 = vmatpush.msra.mxu0 0.0
    %1211 = vmatpush.msra.mxu0 %v894
    %1212 = vmatpush.msra.mxu0 %v893
    %1213 = vmatpush.msra.mxu0 %v892
    %1214 = vmatpush.msra.mxu0 %v891
    %1215 = vmatmul.f32.gmra.mxu0 %v1197
    %v1216 = vpop.f32.mrf.mxu0
    %v1217 = vadd.f32 %v1194, %v1216
    %1218 = vdwg.mxu0
    %v1219 = vadd.f32 %v1217, %v952
    %v1220 = vxor.u32 %v1219, 2147483648
    %v1221 = vmul.f32 %v1220, 1.442695
    %v1222 = vpow.pop %v1221
    %v1223 = vadd.f32 %v1222, 1.0
    %v1224 = vrcp.pop %v1223
    %v1225 = vmul.f32 %v1223, %v1224
    %v1226 = vsub.f32 1.0, %v1225
    %v1227 = vmul.f32 %v1224, %v1226
    %v1228 = vadd.f32 %v1224, %v1227
    %vm1229 = vweird.f32 %v1223
    %vm1230 = vweird.f32 %v1224
    %vm1231 = vmor %vm1229, %vm1230
    %v1232 = vsel %vm1231, %v1224, %v1228
    %v1233 = vand.u32 2147483647, %v1223
    %vm1234 = vcmp.eq.f32.partialorder %v1233, 8.507059e+37
    %v1235 = vand.u32 %v1223, 2147483648
    %v1236 = vor.u32 1.1754944e-38, %v1235
    %v1237 = vsel %vm1234, %v1236, %v1232
    %v1238 = vmul.f32 1.0, %v1237
    %v1239 = vtanh.pop %v1219
    %v1240 = vmul.f32 %v1238, %v1163
    %1242 = vrot.lane.b32.xlu0 %v1239, 64
    %v1243 = vpop.permute.xlu0 %1242
    %v1245 = vmul.f32 %v1238, %v1243
    %1247 = vrot.lane.b32.xlu0 %v1245, 32
    %v1248 = vpop.permute.xlu0 %1247
    %v1250 = vadd.f32 %v1240, %v1248
    %v1251 = vtanh.pop %v1250
    %1253 = vrot.lane.b32.xlu0 %v1251, 64
    %v1254 = vpop.permute.xlu0 %1253
    %v1256 = vmul.f32 %v1238, %v1254
    %v1257 = vld [vmem:[%s610] sm:$0xff]
    %1259 = vrot.lane.b32.xlu0 %v1256, 32
    %v1260 = vpop.permute.xlu0 %1259
    %v1261 = vsel %vm151, %v1260, 0
    %1263 = vmatpush.msra.mxu0 0.0
    %1264 = vmatpush.msra.mxu0 0.0
    %1265 = vmatpush.msra.mxu0 0.0
    %1266 = vmatpush.msra.mxu0 0.0
    %1267 = vmatpush.msra.mxu0 0.0
    %1268 = vmatpush.msra.mxu0 0.0
    %1269 = vmatpush.msra.mxu0 0.0
    %1270 = vmatpush.msra.mxu0 0.0
    %1271 = vmatpush.msra.mxu0 0.0
    %1272 = vmatpush.msra.mxu0 0.0
    %1273 = vmatpush.msra.mxu0 0.0
    %1274 = vmatpush.msra.mxu0 0.0
    %1275 = vmatpush.msra.mxu0 %v898
    %1276 = vmatpush.msra.mxu0 %v897
    %1277 = vmatpush.msra.mxu0 %v896
    %1278 = vmatpush.msra.mxu0 %v895
    %1279 = vmatmul.f32.gmra.mxu0 %v1261
    %v1280 = vpop.f32.mrf.mxu0
    %v1281 = vadd.f32 0.0, %v1280
    %1282 = vdwg.mxu0
    %v1284 = vsel %vm151, %v1257, 0
    %1286 = vmatpush.msra.mxu0 0.0
    %1287 = vmatpush.msra.mxu0 0.0
    %1288 = vmatpush.msra.mxu0 0.0
    %1289 = vmatpush.msra.mxu0 0.0
    %1290 = vmatpush.msra.mxu0 0.0
    %1291 = vmatpush.msra.mxu0 0.0
    %1292 = vmatpush.msra.mxu0 0.0
    %1293 = vmatpush.msra.mxu0 0.0
    %1294 = vmatpush.msra.mxu0 0.0
    %1295 = vmatpush.msra.mxu0 0.0
    %1296 = vmatpush.msra.mxu0 0.0
    %1297 = vmatpush.msra.mxu0 0.0
    %1298 = vmatpush.msra.mxu0 %v894
    %1299 = vmatpush.msra.mxu0 %v893
    %1300 = vmatpush.msra.mxu0 %v892
    %1301 = vmatpush.msra.mxu0 %v891
    %1302 = vmatmul.f32.gmra.mxu0 %v1284
    %v1303 = vpop.f32.mrf.mxu0
    %v1304 = vadd.f32 %v1281, %v1303
    %1305 = vdwg.mxu0
    %v1306 = vadd.f32 %v1304, %v952
    %v1307 = vxor.u32 %v1306, 2147483648
    %v1308 = vmul.f32 %v1307, 1.442695
    %v1309 = vpow.pop %v1308
    %v1310 = vadd.f32 %v1309, 1.0
    %v1311 = vrcp.pop %v1310
    %v1312 = vmul.f32 %v1310, %v1311
    %v1313 = vsub.f32 1.0, %v1312
    %v1314 = vmul.f32 %v1311, %v1313
    %v1315 = vadd.f32 %v1311, %v1314
    %vm1316 = vweird.f32 %v1310
    %vm1317 = vweird.f32 %v1311
    %vm1318 = vmor %vm1316, %vm1317
    %v1319 = vsel %vm1318, %v1311, %v1315
    %v1320 = vand.u32 2147483647, %v1310
    %vm1321 = vcmp.eq.f32.partialorder %v1320, 8.507059e+37
    %v1322 = vand.u32 %v1310, 2147483648
    %v1323 = vor.u32 1.1754944e-38, %v1322
    %v1324 = vsel %vm1321, %v1323, %v1319
    %v1325 = vmul.f32 1.0, %v1324
    %v1326 = vtanh.pop %v1306
    %v1327 = vmul.f32 %v1325, %v1250
    %1329 = vrot.lane.b32.xlu0 %v1326, 64
    %v1330 = vpop.permute.xlu0 %1329
    %v1332 = vmul.f32 %v1325, %v1330
    %1334 = vrot.lane.b32.xlu0 %v1332, 32
    %v1335 = vpop.permute.xlu0 %1334
    %v1337 = vadd.f32 %v1327, %v1335
    %v1338 = vtanh.pop %v1337
    %1340 = vrot.lane.b32.xlu0 %v1338, 64
    %v1341 = vpop.permute.xlu0 %1340
    %v1343 = vmul.f32 %v1325, %v1341
    %v1344 = vld [vmem:[%s701] sm:$0xff]
    %1346 = vrot.lane.b32.xlu0 %v1343, 32
    %v1347 = vpop.permute.xlu0 %1346
    %v1348 = vsel %vm151, %v1347, 0
    %1350 = vmatpush.msra.mxu0 0.0
    %1351 = vmatpush.msra.mxu0 0.0
    %1352 = vmatpush.msra.mxu0 0.0
    %1353 = vmatpush.msra.mxu0 0.0
    %1354 = vmatpush.msra.mxu0 0.0
    %1355 = vmatpush.msra.mxu0 0.0
    %1356 = vmatpush.msra.mxu0 0.0
    %1357 = vmatpush.msra.mxu0 0.0
    %1358 = vmatpush.msra.mxu0 0.0
    %1359 = vmatpush.msra.mxu0 0.0
    %1360 = vmatpush.msra.mxu0 0.0
    %1361 = vmatpush.msra.mxu0 0.0
    %1362 = vmatpush.msra.mxu0 %v898
    %1363 = vmatpush.msra.mxu0 %v897
    %1364 = vmatpush.msra.mxu0 %v896
    %1365 = vmatpush.msra.mxu0 %v895
    %1366 = vmatmul.f32.gmra.mxu0 %v1348
    %v1367 = vpop.f32.mrf.mxu0
    %v1368 = vadd.f32 0.0, %v1367
    %1369 = vdwg.mxu0
    %v1371 = vsel %vm151, %v1344, 0
    %1373 = vmatpush.msra.mxu0 0.0
    %1374 = vmatpush.msra.mxu0 0.0
    %1375 = vmatpush.msra.mxu0 0.0
    %1376 = vmatpush.msra.mxu0 0.0
    %1377 = vmatpush.msra.mxu0 0.0
    %1378 = vmatpush.msra.mxu0 0.0
    %1379 = vmatpush.msra.mxu0 0.0
    %1380 = vmatpush.msra.mxu0 0.0
    %1381 = vmatpush.msra.mxu0 0.0
    %1382 = vmatpush.msra.mxu0 0.0
    %1383 = vmatpush.msra.mxu0 0.0
    %1384 = vmatpush.msra.mxu0 0.0
    %1385 = vmatpush.msra.mxu0 %v894
    %1386 = vmatpush.msra.mxu0 %v893
    %1387 = vmatpush.msra.mxu0 %v892
    %1388 = vmatpush.msra.mxu0 %v891
    %1389 = vmatmul.f32.gmra.mxu0 %v1371
    %v1390 = vpop.f32.mrf.mxu0
    %v1391 = vadd.f32 %v1368, %v1390
    %1392 = vdwg.mxu0
    %v1393 = vadd.f32 %v1391, %v952
    %v1394 = vxor.u32 %v1393, 2147483648
    %v1395 = vmul.f32 %v1394, 1.442695
    %v1396 = vpow.pop %v1395
    %v1397 = vadd.f32 %v1396, 1.0
    %v1398 = vrcp.pop %v1397
    %v1399 = vmul.f32 %v1397, %v1398
    %v1400 = vsub.f32 1.0, %v1399
    %v1401 = vmul.f32 %v1398, %v1400
    %v1402 = vadd.f32 %v1398, %v1401
    %vm1403 = vweird.f32 %v1397
    %vm1404 = vweird.f32 %v1398
    %vm1405 = vmor %vm1403, %vm1404
    %v1406 = vsel %vm1405, %v1398, %v1402
    %v1407 = vand.u32 2147483647, %v1397
    %vm1408 = vcmp.eq.f32.partialorder %v1407, 8.507059e+37
    %v1409 = vand.u32 %v1397, 2147483648
    %v1410 = vor.u32 1.1754944e-38, %v1409
    %v1411 = vsel %vm1408, %v1410, %v1406
    %v1412 = vmul.f32 1.0, %v1411
    %v1413 = vtanh.pop %v1393
    %v1414 = vmul.f32 %v1412, %v1337
    %1416 = vrot.lane.b32.xlu0 %v1413, 64
    %v1417 = vpop.permute.xlu0 %1416
    %v1419 = vmul.f32 %v1412, %v1417
    %1421 = vrot.lane.b32.xlu0 %v1419, 32
    %v1422 = vpop.permute.xlu0 %1421
    %v1424 = vadd.f32 %v1414, %v1422
    %v1425 = vtanh.pop %v1424
    %1427 = vrot.lane.b32.xlu0 %v1425, 64
    %v1428 = vpop.permute.xlu0 %1427
    %v1430 = vmul.f32 %v1412, %v1428
    %v1431 = vld [vmem:[%s792] sm:$0xff]
    %1433 = vrot.lane.b32.xlu0 %v1430, 32
    %v1434 = vpop.permute.xlu0 %1433
    %v1435 = vsel %vm151, %v1434, 0
    %1437 = vmatpush.msra.mxu0 0.0
    %1438 = vmatpush.msra.mxu0 0.0
    %1439 = vmatpush.msra.mxu0 0.0
    %1440 = vmatpush.msra.mxu0 0.0
    %1441 = vmatpush.msra.mxu0 0.0
    %1442 = vmatpush.msra.mxu0 0.0
    %1443 = vmatpush.msra.mxu0 0.0
    %1444 = vmatpush.msra.mxu0 0.0
    %1445 = vmatpush.msra.mxu0 0.0
    %1446 = vmatpush.msra.mxu0 0.0
    %1447 = vmatpush.msra.mxu0 0.0
    %1448 = vmatpush.msra.mxu0 0.0
    %1449 = vmatpush.msra.mxu0 %v898
    %1450 = vmatpush.msra.mxu0 %v897
    %1451 = vmatpush.msra.mxu0 %v896
    %1452 = vmatpush.msra.mxu0 %v895
    %1453 = vmatmul.f32.gmra.mxu0 %v1435
    %v1454 = vpop.f32.mrf.mxu0
    %v1455 = vadd.f32 0.0, %v1454
    %1456 = vdwg.mxu0
    %v1458 = vsel %vm151, %v1431, 0
    %1460 = vmatpush.msra.mxu0 0.0
    %1461 = vmatpush.msra.mxu0 0.0
    %1462 = vmatpush.msra.mxu0 0.0
    %1463 = vmatpush.msra.mxu0 0.0
    %1464 = vmatpush.msra.mxu0 0.0
    %1465 = vmatpush.msra.mxu0 0.0
    %1466 = vmatpush.msra.mxu0 0.0
    %1467 = vmatpush.msra.mxu0 0.0
    %1468 = vmatpush.msra.mxu0 0.0
    %1469 = vmatpush.msra.mxu0 0.0
    %1470 = vmatpush.msra.mxu0 0.0
    %1471 = vmatpush.msra.mxu0 0.0
    %1472 = vmatpush.msra.mxu0 %v894
    %1473 = vmatpush.msra.mxu0 %v893
    %1474 = vmatpush.msra.mxu0 %v892
    %1475 = vmatpush.msra.mxu0 %v891
    %1476 = vmatmul.f32.gmra.mxu0 %v1458
    %v1477 = vpop.f32.mrf.mxu0
    %v1478 = vadd.f32 %v1455, %v1477
    %1479 = vdwg.mxu0
    %v1480 = vadd.f32 %v1478, %v952
    %v1481 = vxor.u32 %v1480, 2147483648
    %v1482 = vmul.f32 %v1481, 1.442695
    %v1483 = vpow.pop %v1482
    %v1484 = vadd.f32 %v1483, 1.0
    %v1485 = vrcp.pop %v1484
    %v1486 = vmul.f32 %v1484, %v1485
    %v1487 = vsub.f32 1.0, %v1486
    %v1488 = vmul.f32 %v1485, %v1487
    %v1489 = vadd.f32 %v1485, %v1488
    %vm1490 = vweird.f32 %v1484
    %vm1491 = vweird.f32 %v1485
    %vm1492 = vmor %vm1490, %vm1491
    %v1493 = vsel %vm1492, %v1485, %v1489
    %v1494 = vand.u32 2147483647, %v1484
    %vm1495 = vcmp.eq.f32.partialorder %v1494, 8.507059e+37
    %v1496 = vand.u32 %v1484, 2147483648
    %v1497 = vor.u32 1.1754944e-38, %v1496
    %v1498 = vsel %vm1495, %v1497, %v1493
    %v1499 = vmul.f32 1.0, %v1498
    %v1500 = vtanh.pop %v1480
    %v1501 = vmul.f32 %v1499, %v1424
    %1503 = vrot.lane.b32.xlu0 %v1500, 64
    %v1504 = vpop.permute.xlu0 %1503
    %v1506 = vmul.f32 %v1499, %v1504
    %1508 = vrot.lane.b32.xlu0 %v1506, 32
    %v1509 = vpop.permute.xlu0 %1508
    %v1511 = vadd.f32 %v1501, %v1509
    %v1512 = vtanh.pop %v1511
    %1514 = vrot.lane.b32.xlu0 %v1512, 64
    %v1515 = vpop.permute.xlu0 %1514
    %v1517 = vmul.f32 %v1499, %v1515
    %v1518 = vld [vmem:[%s883] sm:$0xff]
    %1520 = vrot.lane.b32.xlu0 %v1517, 32
    %v1521 = vpop.permute.xlu0 %1520
    %v1522 = vsel %vm151, %v1521, 0
    %1524 = vmatpush.msra.mxu0 0.0
    %1525 = vmatpush.msra.mxu0 0.0
    %1526 = vmatpush.msra.mxu0 0.0
    %1527 = vmatpush.msra.mxu0 0.0
    %1528 = vmatpush.msra.mxu0 0.0
    %1529 = vmatpush.msra.mxu0 0.0
    %1530 = vmatpush.msra.mxu0 0.0
    %1531 = vmatpush.msra.mxu0 0.0
    %1532 = vmatpush.msra.mxu0 0.0
    %1533 = vmatpush.msra.mxu0 0.0
    %1534 = vmatpush.msra.mxu0 0.0
    %1535 = vmatpush.msra.mxu0 0.0
    %1536 = vmatpush.msra.mxu0 %v898
    %1537 = vmatpush.msra.mxu0 %v897
    %1538 = vmatpush.msra.mxu0 %v896
    %1539 = vmatpush.msra.mxu0 %v895
    %1540 = vmatmul.f32.gmra.mxu0 %v1522
    %v1541 = vpop.f32.mrf.mxu0
    %v1542 = vadd.f32 0.0, %v1541
    %1543 = vdwg.mxu0
    %v1545 = vsel %vm151, %v1518, 0
    %1547 = vmatpush.msra.mxu0 0.0
    %1548 = vmatpush.msra.mxu0 0.0
    %1549 = vmatpush.msra.mxu0 0.0
    %1550 = vmatpush.msra.mxu0 0.0
    %1551 = vmatpush.msra.mxu0 0.0
    %1552 = vmatpush.msra.mxu0 0.0
    %1553 = vmatpush.msra.mxu0 0.0
    %1554 = vmatpush.msra.mxu0 0.0
    %1555 = vmatpush.msra.mxu0 0.0
    %1556 = vmatpush.msra.mxu0 0.0
    %1557 = vmatpush.msra.mxu0 0.0
    %1558 = vmatpush.msra.mxu0 0.0
    %1559 = vmatpush.msra.mxu0 %v894
    %1560 = vmatpush.msra.mxu0 %v893
    %1561 = vmatpush.msra.mxu0 %v892
    %1562 = vmatpush.msra.mxu0 %v891
    %1563 = vmatmul.f32.gmra.mxu0 %v1545
    %v1564 = vpop.f32.mrf.mxu0
    %v1565 = vadd.f32 %v1542, %v1564
    %1566 = vdwg.mxu0
    %v1567 = vadd.f32 %v1565, %v952
    %v1568 = vxor.u32 %v1567, 2147483648
    %v1569 = vmul.f32 %v1568, 1.442695
    %v1570 = vpow.pop %v1569
    %v1571 = vadd.f32 %v1570, 1.0
    %v1572 = vrcp.pop %v1571
    %v1573 = vmul.f32 %v1571, %v1572
    %v1574 = vsub.f32 1.0, %v1573
    %v1575 = vmul.f32 %v1572, %v1574
    %v1576 = vadd.f32 %v1572, %v1575
    %vm1577 = vweird.f32 %v1571
    %vm1578 = vweird.f32 %v1572
    %vm1579 = vmor %vm1577, %vm1578
    %v1580 = vsel %vm1579, %v1572, %v1576
    %v1581 = vand.u32 2147483647, %v1571
    %vm1582 = vcmp.eq.f32.partialorder %v1581, 8.507059e+37
    %v1583 = vand.u32 %v1571, 2147483648
    %v1584 = vor.u32 1.1754944e-38, %v1583
    %v1585 = vsel %vm1582, %v1584, %v1580
    %v1586 = vmul.f32 1.0, %v1585
    %v1587 = vtanh.pop %v1567
    %v1588 = vmul.f32 %v1586, %v1511
    %1590 = vrot.lane.b32.xlu0 %v1587, 64
    %v1591 = vpop.permute.xlu0 %1590
    %v1593 = vmul.f32 %v1586, %v1591
    %1595 = vrot.lane.b32.xlu0 %v1593, 32
    %v1596 = vpop.permute.xlu0 %1595
    %v1598 = vadd.f32 %v1588, %v1596
    %v1599 = vtanh.pop %v1598
    %1601 = vrot.lane.b32.xlu0 %v1599, 64
    %v1602 = vpop.permute.xlu0 %1601
    %v1604 = vmul.f32 %v1586, %v1602
    %1606 = vrot.lane.b32.xlu0 %v1604, 32
    %v1607 = vpop.permute.xlu0 %1606
    %s1609 = scalar_lea.vmem [#allocation15], 8
    %1610 = vst.msk [vmem:[%s1609] sm:$0xff] %vm151, %v1607
    %1612 = vrot.lane.b32.xlu0 %v1598, 96
    %v1613 = vpop.permute.xlu0 %1612
    %s1615 = scalar_lea.vmem [#allocation16], 8
    %1616 = vst.msk [vmem:[%s1615] sm:$0xff] %vm151, %v1613
    %v1617 = vld [vmem:[%s9] sm:$0xff]
    %v1618 = vld [vmem:[%s9 + $0x8] sm:$0xff]
    %v1619 = vld [vmem:[%s9 + $0x10] sm:$0xff]
    %v1620 = vld [vmem:[%s9 + $0x18] sm:$0xff]
    %v1621 = vld [vmem:[#allocation3] sm:$0x1]
    %v1623 = vperm.slane %v1621, 0
    %v1625 = vsel %vm151, %v1607, 0
    %1627 = vmatpush.msra.mxu0 0.0
    %1628 = vmatpush.msra.mxu0 0.0
    %1629 = vmatpush.msra.mxu0 0.0
    %1630 = vmatpush.msra.mxu0 0.0
    %1631 = vmatpush.msra.mxu0 0.0
    %1632 = vmatpush.msra.mxu0 0.0
    %1633 = vmatpush.msra.mxu0 0.0
    %1634 = vmatpush.msra.mxu0 0.0
    %1635 = vmatpush.msra.mxu0 0.0
    %1636 = vmatpush.msra.mxu0 0.0
    %1637 = vmatpush.msra.mxu0 0.0
    %1638 = vmatpush.msra.mxu0 0.0
    %1639 = vmatpush.msra.mxu0 %v1620
    %1640 = vmatpush.msra.mxu0 %v1619
    %1641 = vmatpush.msra.mxu0 %v1618
    %1642 = vmatpush.msra.mxu0 %v1617
    %1643 = vmatmul.f32.gmra.mxu0 %v1625
    %v1644 = vpop.f32.mrf.mxu0
    %v1645 = vadd.f32 %v1623, %v1644
    %1646 = vdwg.mxu0
    %v1647 = vxor.u32 %v1645, 2147483648
    %v1648 = vmul.f32 %v1647, 1.442695
    %v1649 = vpow.pop %v1648
    %v1650 = vadd.f32 %v1649, 1.0
    %v1651 = vrcp.pop %v1650
    %v1652 = vmul.f32 %v1650, %v1651
    %v1653 = vsub.f32 1.0, %v1652
    %v1654 = vmul.f32 %v1651, %v1653
    %v1655 = vadd.f32 %v1651, %v1654
    %vm1656 = vweird.f32 %v1650
    %vm1657 = vweird.f32 %v1651
    %vm1658 = vmor %vm1656, %vm1657
    %v1659 = vsel %vm1658, %v1651, %v1655
    %v1660 = vand.u32 2147483647, %v1650
    %vm1661 = vcmp.eq.f32.partialorder %v1660, 8.507059e+37
    %v1662 = vand.u32 %v1650, 2147483648
    %v1663 = vor.u32 1.1754944e-38, %v1662
    %v1664 = vsel %vm1661, %v1663, %v1659
    %v1665 = vmul.f32 1.0, %v1664
    %vm1666 = vcmask 7168
    %1667 = vst.msk [vmem:[%s11] sm:$0xff] %vm1666, %v1665
    // Predicated region
    $region70: #{tpu_custom_call.1} parent=1 // pred_check
      _
    $region71: #{tpu_custom_call.1} parent=1 // pred_check_branch
      %1669 = sbr.rel (0) target = $region73
    $region72: #{tpu_custom_call.1} parent=1 // pred_region
      _
    $region73: #{tpu_custom_call.1} parent=1 // pred_fallthru
      _
    // Predicated region
    $region74: #{tpu_custom_call.1} parent=1 // pred_check
      _
    $region75: #{tpu_custom_call.1} parent=1 // pred_check_branch
      %1671 = sbr.rel (0) target = $region77
    $region76: #{tpu_custom_call.1} parent=1 // pred_region
      %1673 = vsyncadd [#allocation6], 0
      %s1674 = sshll.u32 [#allocation15], 4
      %s1675 = int_to_ptr.vmem [resolvable:$true] %s1674
      %s1676 = sshll.u32 %s12, 4
      %s1677 = int_to_ptr.hbm [resolvable:$true] %s1676
      %1682 = dma.vmem_to_hbm [thread:$0]  %s1675, 256, %s1677, [#allocation6], 128, 128, 8
    $region77: #{tpu_custom_call.1} parent=1 // pred_fallthru
      _
    // Predicated region
    $region78: #{tpu_custom_call.1} parent=1 // pred_check
      _
    $region79: #{tpu_custom_call.1} parent=1 // pred_check_branch
      %1684 = sbr.rel (0) target = $region81
    $region80: #{tpu_custom_call.1} parent=1 // pred_region
      %1686 = vsyncadd [#allocation17], 0
      %s1687 = sshll.u32 [#allocation16], 4
      %s1688 = int_to_ptr.vmem [resolvable:$true] %s1687
      %s1689 = sshll.u32 %s13, 4
      %s1690 = int_to_ptr.hbm [resolvable:$true] %s1689
      %1695 = dma.vmem_to_hbm [thread:$0]  %s1688, 256, %s1690, [#allocation17], 128, 128, 8
    $region81: #{tpu_custom_call.1} parent=1 // pred_fallthru
      _
    // Predicated region
    $region82: #{tpu_custom_call.1} parent=1 // pred_check
      _
    $region83: #{tpu_custom_call.1} parent=1 // pred_check_branch
      %1697 = sbr.rel (0) target = $region85
    $region84: #{tpu_custom_call.1} parent=1 // pred_region
      _
    $region85: #{tpu_custom_call.1} parent=1 // pred_fallthru
      _
    // Predicated region
    $region86: #{tpu_custom_call.1} parent=1 // pred_check
      _
    $region87: #{tpu_custom_call.1} parent=1 // pred_check_branch
      %1699 = sbr.rel (0) target = $region89
    $region88: #{tpu_custom_call.1} parent=1 // pred_region
      %1701 = dma.done [#allocation6], 256
    $region89: #{tpu_custom_call.1} parent=1 // pred_fallthru
      _
    // Predicated region
    $region90: #{tpu_custom_call.1} parent=1 // pred_check
      _
    $region91: #{tpu_custom_call.1} parent=1 // pred_check_branch
      %1703 = sbr.rel (0) target = $region93
    $region92: #{tpu_custom_call.1} parent=1 // pred_region
      %1705 = dma.done [#allocation17], 256
    $region93: #{tpu_custom_call.1} parent=1 // pred_fallthru
      _
    %1706 = vsyncpa [#allocation5], 1
    %1707 = vsyncpa [#allocation8], 1
    %1708 = vsyncpa [#allocation11], 1
    %1709 = vsyncpa [#allocation14], 1
    %1710 = vsyncpa [#allocation6], 1
    %1711 = vsyncpa [#allocation17], 1

</llo_original>
